<compile_context>
chip_gen: v6e
topology: v6e:2x2x1
jax: 0.10.0
libtpu: 0.0.40
codegen_flags: <defaults>
</compile_context>

<pallas_src>
import functools

import numpy as np
import jax
import jax.numpy as jnp
from jax.experimental import pallas as pl
from jax.experimental.pallas import tpu as pltpu


def spatial_attention_kernel(x_ref, mask_ref, w_ref, b_ref, o_ref,
                             pmax_ref, pavg_ref, ptmp_ref, *, W, HWP, PAD):
    """P batch images per grid step.

    x_ref    : (P, C, HWP)       VMEM  input block (native dtype)
    mask_ref : (7, HWP)          VMEM  per-offset column masks (0/1, f32)
    w_ref    : (2, 49)           SMEM  conv weights (row 0 -> max map, 1 -> avg)
    b_ref    : (1,)              SMEM  conv bias
    o_ref    : (P, C, HWP)       VMEM  output block (native dtype)
    pmax_ref : (P, HWP + 2*PAD)  VMEM  zero-halo'd channel-max map
    pavg_ref : (P, HWP + 2*PAD)  VMEM  zero-halo'd channel-mean map
    ptmp_ref : (P, HWP + 8)      VMEM  bounce buffer for horizontal tap shifts
    """
    f32 = jnp.float32
    p = o_ref.shape[0]
    c = x_ref.shape[1]

    # Re-zero only the halos each step (the body is fully overwritten below);
    # per-step so a megacore-split grid stays correct (each core owns scratch).
    pmax_ref[:, :PAD] = jnp.zeros((p, PAD), f32)
    pavg_ref[:, :PAD] = jnp.zeros((p, PAD), f32)
    pmax_ref[:, PAD + HWP:] = jnp.zeros((p, PAD), f32)
    pavg_ref[:, PAD + HWP:] = jnp.zeros((p, PAD), f32)
    ptmp_ref[:, :4] = jnp.zeros((p, 4), f32)
    ptmp_ref[:, 4 + HWP:] = jnp.zeros((p, 4), f32)

    # Channel pools, staged per image (2-D ops) into the zero-halo'd scratch so
    # vertical out-of-bounds taps read zeros.  max is exact in the native
    # dtype; the mean accumulates in f32.
    for pi in range(p):
        xm = jnp.max(x_ref[pi], axis=0, keepdims=True)                 # (1, HWP)
        xs = jnp.sum(x_ref[pi], axis=0, keepdims=True, dtype=f32)      # (1, HWP)
        pmax_ref[pi:pi + 1, PAD:PAD + HWP] = xm.astype(f32)
        pavg_ref[pi:pi + 1, PAD:PAD + HWP] = xs * (1.0 / c)

    # 14 vertically shifted base rows (one per (map, dh)), loaded once and
    # reused by all 7 horizontal offsets (the conv is linear, so the per-kw
    # weighted sum over kh can be shifted horizontally after accumulation).
    bases = []
    for kh in range(7):
        off = PAD + (kh - 3) * W
        bases.append((pmax_ref[:, off:off + HWP], pavg_ref[:, off:off + HWP]))

    acc = jnp.zeros((p, HWP), f32)
    for kw in range(7):
        dw = kw - 3
        part = jnp.zeros((p, HWP), f32)
        for kh in range(7):
            t = kh * 7 + kw
            bm, ba = bases[kh]
            part = part + w_ref[0, t] * bm + w_ref[1, t] * ba
        if dw != 0:
            # Horizontal tap shift via the 4-lane-padded bounce buffer; the
            # lanes that cross a row boundary are zeroed by the column mask.
            ptmp_ref[:, 4:4 + HWP] = part
            part = ptmp_ref[:, 4 + dw:4 + dw + HWP] * mask_ref[kw:kw + 1, :]
        acc = acc + part

    satt = jax.nn.sigmoid(acc + b_ref[0])                              # (P, HWP) f32
    scale = satt.astype(o_ref.dtype)
    # Final scale in the input dtype (bf16 VALU on v6e/v7x), per image.
    for pi in range(p):
        o_ref[pi] = x_ref[pi] * scale[pi:pi + 1, :]


def _resident_bytes(p, C, HWP, PAD, itemsize):
    L = HWP + 2 * PAD
    return (4 * p * C * HWP * itemsize      # double-buffered input + output blocks
            + p * C * HWP * 4               # worst-case f32 temp for the mean reduce
            + 2 * p * L * 4                 # pooled-map scratch
            + p * (HWP + 8) * 4             # shift bounce buffer
            + 2 * 7 * HWP * 4               # column masks (double-buffered)
            + 16 * p * HWP * 4)             # conv base rows / accumulators


def _choose_batch_block(B, C, HWP, PAD, itemsize):
    """Largest per-step batch pack P (<=8) that fits a ~20 MiB VMEM budget and
    keeps enough grid steps for pipelining when the batch is large enough."""
    budget = 20 * 2**20
    best = 1
    for p_cand in range(1, min(8, B) + 1):
        if B % p_cand:
            continue
        if _resident_bytes(p_cand, C, HWP, PAD, itemsize) > budget:
            continue
        steps = B // p_cand
        if B >= 8 and steps < 4:
            continue
        if B >= 4 and steps < 2:
            continue
        best = p_cand
    return best


def spatial_attention_forward(x_nchw, conv_w, conv_b):
    """x: (B, C, H, W) (f32 or bf16); conv_w: (1, 2, 7, 7); conv_b: (1,)."""
    B, C, H, W = x_nchw.shape
    HW = H * W
    HWP = ((HW + 127) // 128) * 128        # lane-dense spatial length
    PAD = 3 * W + 3                        # covers all flattened vertical tap offsets
    L = HWP + 2 * PAD
    dtype = x_nchw.dtype
    itemsize = jnp.dtype(dtype).itemsize

    x2 = x_nchw.reshape(B, C, HW)
    if HWP != HW:
        # Zero pad => pooled tails are exactly zero; output tail is sliced off.
        x2 = jnp.pad(x2, ((0, 0), (0, 0), (0, HWP - HW)))

    w2 = conv_w.reshape(2, 49).astype(jnp.float32)     # [pool channel, kh*7+kw]
    bc = conv_b.reshape(1).astype(jnp.float32)

    # Per-offset column masks for the horizontal (row-wrap) conv boundary;
    # built once at trace time and shared by every grid step.
    col = np.arange(HWP) % W
    masks = np.stack([((col + (kw - 3) >= 0) & (col + (kw - 3) < W))
                      for kw in range(7)]).astype(np.float32)
    masks = jnp.asarray(masks)

    P = _choose_batch_block(B, C, HWP, PAD, itemsize)
    vmem_bytes = int(min(32 * 2**20,
                         max(_resident_bytes(P, C, HWP, PAD, itemsize) + (4 << 20),
                             8 << 20)))

    kernel = functools.partial(spatial_attention_kernel, W=W, HWP=HWP, PAD=PAD)
    out = pl.pallas_call(
        kernel,
        out_shape=jax.ShapeDtypeStruct((B, C, HWP), dtype),
        grid=(B // P,),
        in_specs=[
            pl.BlockSpec((P, C, HWP), lambda b: (b, 0, 0)),
            pl.BlockSpec((7, HWP), lambda b: (0, 0)),
            pl.BlockSpec(memory_space=pltpu.MemorySpace.SMEM),
            pl.BlockSpec(memory_space=pltpu.MemorySpace.SMEM),
        ],
        out_specs=pl.BlockSpec((P, C, HWP), lambda b: (b, 0, 0)),
        scratch_shapes=[
            pltpu.VMEM((P, L), jnp.float32),
            pltpu.VMEM((P, L), jnp.float32),
            pltpu.VMEM((P, HWP + 8), jnp.float32),
        ],
        compiler_params=pltpu.CompilerParams(
            dimension_semantics=("parallel",),
            vmem_limit_bytes=vmem_bytes,
        ),
    )(x2, masks, w2, bc)

    if HWP != HW:
        out = out[:, :, :HW]
    return out.reshape(B, C, H, W)


def ref_spatial_attention(x, wconv, bconv):
    """Pure numpy (float64) reference matching the PyTorch forward."""
    B, C, H, W = x.shape
    mp = x.max(axis=1)                                   # (B, H, W)
    ap = x.mean(axis=1)
    pm = np.pad(mp, ((0, 0), (3, 3), (3, 3)))
    pa = np.pad(ap, ((0, 0), (3, 3), (3, 3)))
    y = np.zeros((B, H, W), dtype=x.dtype)
    for kh in range(7):
        for kw in range(7):
            y += wconv[0, 0, kh, kw] * pm[:, kh:kh + H, kw:kw + W]
            y += wconv[0, 1, kh, kw] * pa[:, kh:kh + H, kw:kw + W]
    y += bconv[0]
    s = 1.0 / (1.0 + np.exp(-y))
    return x * s[:, None, :, :]


if __name__ == "__main__":
    def run_case(B, C, H, W, dtype, atol, rtol):
        key = jax.random.PRNGKey(0)
        kx, kw_, kb = jax.random.split(key, 3)
        x = jax.random.normal(kx, (B, C, H, W), jnp.float32).astype(dtype)
        conv_w = 0.1 * jax.random.normal(kw_, (1, 2, 7, 7), jnp.float32)
        conv_b = 0.1 * jax.random.normal(kb, (1,), jnp.float32)

        out = jax.block_until_ready(spatial_attention_forward(x, conv_w, conv_b))

        ref = ref_spatial_attention(np.asarray(x.astype(jnp.float32), np.float64),
                                    np.asarray(conv_w, np.float64),
                                    np.asarray(conv_b, np.float64))
        out64 = np.asarray(out.astype(jnp.float32), np.float64)
        err = float(np.max(np.abs(out64 - ref)))
        if not np.allclose(out64, ref, atol=atol, rtol=rtol):
            raise AssertionError(
                f"mismatch ({B},{C},{H},{W}) {dtype}: max abs err = {err}")

    # Main case (shapes implied by the module; f32).
    run_case(2, 4, 16, 16, jnp.float32, 1e-4, 1e-4)
    # Lane-padded spatial size (14x14 -> 256 lanes) with batch packing + grid steps.
    run_case(8, 4, 14, 14, jnp.float32, 1e-4, 1e-4)
    # Native bf16 I/O path (f32 conv/softmax accumulation in-kernel).
    run_case(2, 4, 16, 16, jnp.bfloat16, 3e-2, 3e-2)

    print("KERNEL_OK")
</pallas_src>

<mosaic_0001>
module attributes {stable_mosaic.version = 11 : i64} {
  func.func @spatial_attention_kernel(%arg0: i32, %arg1: memref<2x4x256xf32, #tpu.memory_space<vmem>>, %arg2: memref<7x256xf32, #tpu.memory_space<vmem>>, %arg3: memref<2x49xf32, #tpu.memory_space<smem>>, %arg4: memref<1xf32, #tpu.memory_space<smem>>, %arg5: memref<2x4x256xf32, #tpu.memory_space<vmem>>, %arg6: memref<2x358xf32, #tpu.memory_space<vmem>>, %arg7: memref<2x358xf32, #tpu.memory_space<vmem>>, %arg8: memref<2x264xf32, #tpu.memory_space<vmem>>) attributes {dimension_semantics = [#tpu.dimension_semantics<parallel>], iteration_bounds = array<i64: 1>, scalar_prefetch = 0 : i64, scratch_operands = 3 : i64, tpu.core_type = #tpu.core_type<tc>, window_params = [{transform_indices = @transform_0, window_bounds = array<i64: 2, 4, 256>}, {pipeline_mode = #tpu.pipeline_mode<synchronous>, transform_indices = @transform_1, window_bounds = array<i64: 7, 256>}, {transform_indices = @transform_2, window_bounds = array<i64: 2, 49>}, {transform_indices = @transform_3, window_bounds = array<i64: 1>}, {transform_indices = @transform_4, window_bounds = array<i64: 2, 4, 256>}]} {
    %cst = arith.constant 0.000000e+00 : f32
    %0 = vector.broadcast %cst : f32 to vector<2x51xf32>
    %c0 = arith.constant 0 : index
    %c0_0 = arith.constant 0 : index
    %1 = vector.load %arg6[%c0, %c0_0] : memref<2x358xf32, #tpu.memory_space<vmem>>, vector<2x51xf32>
    tpu.vector_store %arg6[%c0, %c0_0], %0 {strides = array<i32>} : memref<2x358xf32, #tpu.memory_space<vmem>>, vector<2x51xf32>,
    %cst_1 = arith.constant 0.000000e+00 : f32
    %2 = vector.broadcast %cst_1 : f32 to vector<2x51xf32>
    %c0_2 = arith.constant 0 : index
    %c0_3 = arith.constant 0 : index
    %3 = vector.load %arg7[%c0_2, %c0_3] : memref<2x358xf32, #tpu.memory_space<vmem>>, vector<2x51xf32>
    tpu.vector_store %arg7[%c0_2, %c0_3], %2 {strides = array<i32>} : memref<2x358xf32, #tpu.memory_space<vmem>>, vector<2x51xf32>,
    %cst_4 = arith.constant 0.000000e+00 : f32
    %4 = vector.broadcast %cst_4 : f32 to vector<2x51xf32>
    %c0_5 = arith.constant 0 : index
    %c307 = arith.constant 307 : index
    %5 = vector.load %arg6[%c0_5, %c307] : memref<2x358xf32, #tpu.memory_space<vmem>>, vector<2x51xf32>
    tpu.vector_store %arg6[%c0_5, %c307], %4 {strides = array<i32>} : memref<2x358xf32, #tpu.memory_space<vmem>>, vector<2x51xf32>,
    %cst_6 = arith.constant 0.000000e+00 : f32
    %6 = vector.broadcast %cst_6 : f32 to vector<2x51xf32>
    %c0_7 = arith.constant 0 : index
    %c307_8 = arith.constant 307 : index
    %7 = vector.load %arg7[%c0_7, %c307_8] : memref<2x358xf32, #tpu.memory_space<vmem>>, vector<2x51xf32>
    tpu.vector_store %arg7[%c0_7, %c307_8], %6 {strides = array<i32>} : memref<2x358xf32, #tpu.memory_space<vmem>>, vector<2x51xf32>,
    %cst_9 = arith.constant 0.000000e+00 : f32
    %8 = vector.broadcast %cst_9 : f32 to vector<2x4xf32>
    %c0_10 = arith.constant 0 : index
    %c0_11 = arith.constant 0 : index
    %9 = vector.load %arg8[%c0_10, %c0_11] : memref<2x264xf32, #tpu.memory_space<vmem>>, vector<2x4xf32>
    tpu.vector_store %arg8[%c0_10, %c0_11], %8 {strides = array<i32>} : memref<2x264xf32, #tpu.memory_space<vmem>>, vector<2x4xf32>,
    %cst_12 = arith.constant 0.000000e+00 : f32
    %10 = vector.broadcast %cst_12 : f32 to vector<2x4xf32>
    %c0_13 = arith.constant 0 : index
    %c260 = arith.constant 260 : index
    %11 = vector.load %arg8[%c0_13, %c260] : memref<2x264xf32, #tpu.memory_space<vmem>>, vector<2x4xf32>
    tpu.vector_store %arg8[%c0_13, %c260], %10 {strides = array<i32>} : memref<2x264xf32, #tpu.memory_space<vmem>>, vector<2x4xf32>,
    %c0_14 = arith.constant 0 : index
    %c0_15 = arith.constant 0 : index
    %c0_16 = arith.constant 0 : index
    %12 = vector.load %arg1[%c0_14, %c0_15, %c0_16] : memref<2x4x256xf32, #tpu.memory_space<vmem>>, vector<1x4x256xf32>
    %13 = vector.shape_cast %12 : vector<1x4x256xf32> to vector<4x256xf32>
    %cst_17 = arith.constant dense<0xFF800000> : vector<256xf32>
    %14 = vector.multi_reduction <maximumf>, %13, %cst_17 [0] : vector<4x256xf32> to vector<256xf32>
    %15 = vector.shape_cast %14 : vector<256xf32> to vector<1x256xf32>
    %c0_18 = arith.constant 0 : index
    %c0_19 = arith.constant 0 : index
    %c0_20 = arith.constant 0 : index
    %16 = vector.load %arg1[%c0_18, %c0_19, %c0_20] : memref<2x4x256xf32, #tpu.memory_space<vmem>>, vector<1x4x256xf32>
    %17 = vector.shape_cast %16 : vector<1x4x256xf32> to vector<4x256xf32>
    %cst_21 = arith.constant dense<0.000000e+00> : vector<256xf32>
    %18 = vector.multi_reduction <add>, %17, %cst_21 [0] : vector<4x256xf32> to vector<256xf32>
    %19 = vector.shape_cast %18 : vector<256xf32> to vector<1x256xf32>
    %c0_22 = arith.constant 0 : index
    %c51 = arith.constant 51 : index
    %20 = vector.load %arg6[%c0_22, %c51] : memref<2x358xf32, #tpu.memory_space<vmem>>, vector<1x256xf32>
    tpu.vector_store %arg6[%c0_22, %c51], %15 {strides = array<i32>} : memref<2x358xf32, #tpu.memory_space<vmem>>, vector<1x256xf32>,
    %cst_23 = arith.constant 2.500000e-01 : f32
    %21 = vector.broadcast %cst_23 : f32 to vector<1x256xf32>
    %22 = arith.mulf %19, %21 : vector<1x256xf32>
    %c0_24 = arith.constant 0 : index
    %c51_25 = arith.constant 51 : index
    %23 = vector.load %arg7[%c0_24, %c51_25] : memref<2x358xf32, #tpu.memory_space<vmem>>, vector<1x256xf32>
    tpu.vector_store %arg7[%c0_24, %c51_25], %22 {strides = array<i32>} : memref<2x358xf32, #tpu.memory_space<vmem>>, vector<1x256xf32>,
    %c1 = arith.constant 1 : index
    %c0_26 = arith.constant 0 : index
    %c0_27 = arith.constant 0 : index
    %24 = vector.load %arg1[%c1, %c0_26, %c0_27] : memref<2x4x256xf32, #tpu.memory_space<vmem>>, vector<1x4x256xf32>
    %25 = vector.shape_cast %24 : vector<1x4x256xf32> to vector<4x256xf32>
    %cst_28 = arith.constant dense<0xFF800000> : vector<256xf32>
    %26 = vector.multi_reduction <maximumf>, %25, %cst_28 [0] : vector<4x256xf32> to vector<256xf32>
    %27 = vector.shape_cast %26 : vector<256xf32> to vector<1x256xf32>
    %c1_29 = arith.constant 1 : index
    %c0_30 = arith.constant 0 : index
    %c0_31 = arith.constant 0 : index
    %28 = vector.load %arg1[%c1_29, %c0_30, %c0_31] : memref<2x4x256xf32, #tpu.memory_space<vmem>>, vector<1x4x256xf32>
    %29 = vector.shape_cast %28 : vector<1x4x256xf32> to vector<4x256xf32>
    %cst_32 = arith.constant dense<0.000000e+00> : vector<256xf32>
    %30 = vector.multi_reduction <add>, %29, %cst_32 [0] : vector<4x256xf32> to vector<256xf32>
    %31 = vector.shape_cast %30 : vector<256xf32> to vector<1x256xf32>
    %c1_33 = arith.constant 1 : index
    %c51_34 = arith.constant 51 : index
    %32 = vector.load %arg6[%c1_33, %c51_34] : memref<2x358xf32, #tpu.memory_space<vmem>>, vector<1x256xf32>
    tpu.vector_store %arg6[%c1_33, %c51_34], %27 {strides = array<i32>} : memref<2x358xf32, #tpu.memory_space<vmem>>, vector<1x256xf32>,
    %cst_35 = arith.constant 2.500000e-01 : f32
    %33 = vector.broadcast %cst_35 : f32 to vector<1x256xf32>
    %34 = arith.mulf %31, %33 : vector<1x256xf32>
    %c1_36 = arith.constant 1 : index
    %c51_37 = arith.constant 51 : index
    %35 = vector.load %arg7[%c1_36, %c51_37] : memref<2x358xf32, #tpu.memory_space<vmem>>, vector<1x256xf32>
    tpu.vector_store %arg7[%c1_36, %c51_37], %34 {strides = array<i32>} : memref<2x358xf32, #tpu.memory_space<vmem>>, vector<1x256xf32>,
    %c0_38 = arith.constant 0 : index
    %c3 = arith.constant 3 : index
    %36 = vector.load %arg6[%c0_38, %c3] : memref<2x358xf32, #tpu.memory_space<vmem>>, vector<2x256xf32>
    %c0_39 = arith.constant 0 : index
    %c3_40 = arith.constant 3 : index
    %37 = vector.load %arg7[%c0_39, %c3_40] : memref<2x358xf32, #tpu.memory_space<vmem>>, vector<2x256xf32>
    %c0_41 = arith.constant 0 : index
    %c19 = arith.constant 19 : index
    %38 = vector.load %arg6[%c0_41, %c19] : memref<2x358xf32, #tpu.memory_space<vmem>>, vector<2x256xf32>
    %c0_42 = arith.constant 0 : index
    %c19_43 = arith.constant 19 : index
    %39 = vector.load %arg7[%c0_42, %c19_43] : memref<2x358xf32, #tpu.memory_space<vmem>>, vector<2x256xf32>
    %c0_44 = arith.constant 0 : index
    %c35 = arith.constant 35 : index
    %40 = vector.load %arg6[%c0_44, %c35] : memref<2x358xf32, #tpu.memory_space<vmem>>, vector<2x256xf32>
    %c0_45 = arith.constant 0 : index
    %c35_46 = arith.constant 35 : index
    %41 = vector.load %arg7[%c0_45, %c35_46] : memref<2x358xf32, #tpu.memory_space<vmem>>, vector<2x256xf32>
    %c0_47 = arith.constant 0 : index
    %c51_48 = arith.constant 51 : index
    %42 = vector.load %arg6[%c0_47, %c51_48] : memref<2x358xf32, #tpu.memory_space<vmem>>, vector<2x256xf32>
    %c0_49 = arith.constant 0 : index
    %c51_50 = arith.constant 51 : index
    %43 = vector.load %arg7[%c0_49, %c51_50] : memref<2x358xf32, #tpu.memory_space<vmem>>, vector<2x256xf32>
    %c0_51 = arith.constant 0 : index
    %c67 = arith.constant 67 : index
    %44 = vector.load %arg6[%c0_51, %c67] : memref<2x358xf32, #tpu.memory_space<vmem>>, vector<2x256xf32>
    %c0_52 = arith.constant 0 : index
    %c67_53 = arith.constant 67 : index
    %45 = vector.load %arg7[%c0_52, %c67_53] : memref<2x358xf32, #tpu.memory_space<vmem>>, vector<2x256xf32>
    %c0_54 = arith.constant 0 : index
    %c83 = arith.constant 83 : index
    %46 = vector.load %arg6[%c0_54, %c83] : memref<2x358xf32, #tpu.memory_space<vmem>>, vector<2x256xf32>
    %c0_55 = arith.constant 0 : index
    %c83_56 = arith.constant 83 : index
    %47 = vector.load %arg7[%c0_55, %c83_56] : memref<2x358xf32, #tpu.memory_space<vmem>>, vector<2x256xf32>
    %c0_57 = arith.constant 0 : index
    %c99 = arith.constant 99 : index
    %48 = vector.load %arg6[%c0_57, %c99] : memref<2x358xf32, #tpu.memory_space<vmem>>, vector<2x256xf32>
    %c0_58 = arith.constant 0 : index
    %c99_59 = arith.constant 99 : index
    %49 = vector.load %arg7[%c0_58, %c99_59] : memref<2x358xf32, #tpu.memory_space<vmem>>, vector<2x256xf32>
    %cst_60 = arith.constant 0.000000e+00 : f32
    %50 = vector.broadcast %cst_60 : f32 to vector<2x256xf32>
    %cst_61 = arith.constant 0.000000e+00 : f32
    %51 = vector.broadcast %cst_61 : f32 to vector<2x256xf32>
    %c0_62 = arith.constant 0 : index
    %c0_63 = arith.constant 0 : index
    %52 = memref.load %arg3[%c0_62, %c0_63] : memref<2x49xf32, #tpu.memory_space<smem>>
    %53 = vector.broadcast %52 : f32 to vector<2x256xf32>
    %54 = arith.mulf %53, %36 : vector<2x256xf32>
    %55 = arith.addf %51, %54 : vector<2x256xf32>
    %c1_64 = arith.constant 1 : index
    %c0_65 = arith.constant 0 : index
    %56 = memref.load %arg3[%c1_64, %c0_65] : memref<2x49xf32, #tpu.memory_space<smem>>
    %57 = vector.broadcast %56 : f32 to vector<2x256xf32>
    %58 = arith.mulf %57, %37 : vector<2x256xf32>
    %59 = arith.addf %55, %58 : vector<2x256xf32>
    %c0_66 = arith.constant 0 : index
    %c7 = arith.constant 7 : index
    %60 = memref.load %arg3[%c0_66, %c7] : memref<2x49xf32, #tpu.memory_space<smem>>
    %61 = vector.broadcast %60 : f32 to vector<2x256xf32>
    %62 = arith.mulf %61, %38 : vector<2x256xf32>
    %63 = arith.addf %59, %62 : vector<2x256xf32>
    %c1_67 = arith.constant 1 : index
    %c7_68 = arith.constant 7 : index
    %64 = memref.load %arg3[%c1_67, %c7_68] : memref<2x49xf32, #tpu.memory_space<smem>>
    %65 = vector.broadcast %64 : f32 to vector<2x256xf32>
    %66 = arith.mulf %65, %39 : vector<2x256xf32>
    %67 = arith.addf %63, %66 : vector<2x256xf32>
    %c0_69 = arith.constant 0 : index
    %c14 = arith.constant 14 : index
    %68 = memref.load %arg3[%c0_69, %c14] : memref<2x49xf32, #tpu.memory_space<smem>>
    %69 = vector.broadcast %68 : f32 to vector<2x256xf32>
    %70 = arith.mulf %69, %40 : vector<2x256xf32>
    %71 = arith.addf %67, %70 : vector<2x256xf32>
    %c1_70 = arith.constant 1 : index
    %c14_71 = arith.constant 14 : index
    %72 = memref.load %arg3[%c1_70, %c14_71] : memref<2x49xf32, #tpu.memory_space<smem>>
    %73 = vector.broadcast %72 : f32 to vector<2x256xf32>
    %74 = arith.mulf %73, %41 : vector<2x256xf32>
    %75 = arith.addf %71, %74 : vector<2x256xf32>
    %c0_72 = arith.constant 0 : index
    %c21 = arith.constant 21 : index
    %76 = memref.load %arg3[%c0_72, %c21] : memref<2x49xf32, #tpu.memory_space<smem>>
    %77 = vector.broadcast %76 : f32 to vector<2x256xf32>
    %78 = arith.mulf %77, %42 : vector<2x256xf32>
    %79 = arith.addf %75, %78 : vector<2x256xf32>
    %c1_73 = arith.constant 1 : index
    %c21_74 = arith.constant 21 : index
    %80 = memref.load %arg3[%c1_73, %c21_74] : memref<2x49xf32, #tpu.memory_space<smem>>
    %81 = vector.broadcast %80 : f32 to vector<2x256xf32>
    %82 = arith.mulf %81, %43 : vector<2x256xf32>
    %83 = arith.addf %79, %82 : vector<2x256xf32>
    %c0_75 = arith.constant 0 : index
    %c28 = arith.constant 28 : index
    %84 = memref.load %arg3[%c0_75, %c28] : memref<2x49xf32, #tpu.memory_space<smem>>
    %85 = vector.broadcast %84 : f32 to vector<2x256xf32>
    %86 = arith.mulf %85, %44 : vector<2x256xf32>
    %87 = arith.addf %83, %86 : vector<2x256xf32>
    %c1_76 = arith.constant 1 : index
    %c28_77 = arith.constant 28 : index
    %88 = memref.load %arg3[%c1_76, %c28_77] : memref<2x49xf32, #tpu.memory_space<smem>>
    %89 = vector.broadcast %88 : f32 to vector<2x256xf32>
    %90 = arith.mulf %89, %45 : vector<2x256xf32>
    %91 = arith.addf %87, %90 : vector<2x256xf32>
    %c0_78 = arith.constant 0 : index
    %c35_79 = arith.constant 35 : index
    %92 = memref.load %arg3[%c0_78, %c35_79] : memref<2x49xf32, #tpu.memory_space<smem>>
    %93 = vector.broadcast %92 : f32 to vector<2x256xf32>
    %94 = arith.mulf %93, %46 : vector<2x256xf32>
    %95 = arith.addf %91, %94 : vector<2x256xf32>
    %c1_80 = arith.constant 1 : index
    %c35_81 = arith.constant 35 : index
    %96 = memref.load %arg3[%c1_80, %c35_81] : memref<2x49xf32, #tpu.memory_space<smem>>
    %97 = vector.broadcast %96 : f32 to vector<2x256xf32>
    %98 = arith.mulf %97, %47 : vector<2x256xf32>
    %99 = arith.addf %95, %98 : vector<2x256xf32>
    %c0_82 = arith.constant 0 : index
    %c42 = arith.constant 42 : index
    %100 = memref.load %arg3[%c0_82, %c42] : memref<2x49xf32, #tpu.memory_space<smem>>
    %101 = vector.broadcast %100 : f32 to vector<2x256xf32>
    %102 = arith.mulf %101, %48 : vector<2x256xf32>
    %103 = arith.addf %99, %102 : vector<2x256xf32>
    %c1_83 = arith.constant 1 : index
    %c42_84 = arith.constant 42 : index
    %104 = memref.load %arg3[%c1_83, %c42_84] : memref<2x49xf32, #tpu.memory_space<smem>>
    %105 = vector.broadcast %104 : f32 to vector<2x256xf32>
    %106 = arith.mulf %105, %49 : vector<2x256xf32>
    %107 = arith.addf %103, %106 : vector<2x256xf32>
    %c0_85 = arith.constant 0 : index
    %c4 = arith.constant 4 : index
    %108 = vector.load %arg8[%c0_85, %c4] : memref<2x264xf32, #tpu.memory_space<vmem>>, vector<2x256xf32>
    tpu.vector_store %arg8[%c0_85, %c4], %107 {strides = array<i32>} : memref<2x264xf32, #tpu.memory_space<vmem>>, vector<2x256xf32>,
    %c0_86 = arith.constant 0 : index
    %c1_87 = arith.constant 1 : index
    %109 = vector.load %arg8[%c0_86, %c1_87] : memref<2x264xf32, #tpu.memory_space<vmem>>, vector<2x256xf32>
    %c0_88 = arith.constant 0 : index
    %c0_89 = arith.constant 0 : index
    %110 = vector.load %arg2[%c0_88, %c0_89] : memref<7x256xf32, #tpu.memory_space<vmem>>, vector<1x256xf32>
    %111 = vector.broadcast %110 : vector<1x256xf32> to vector<2x256xf32>
    %112 = arith.mulf %109, %111 : vector<2x256xf32>
    %113 = arith.addf %50, %112 : vector<2x256xf32>
    %cst_90 = arith.constant 0.000000e+00 : f32
    %114 = vector.broadcast %cst_90 : f32 to vector<2x256xf32>
    %c0_91 = arith.constant 0 : index
    %c1_92 = arith.constant 1 : index
    %115 = memref.load %arg3[%c0_91, %c1_92] : memref<2x49xf32, #tpu.memory_space<smem>>
    %116 = vector.broadcast %115 : f32 to vector<2x256xf32>
    %117 = arith.mulf %116, %36 : vector<2x256xf32>
    %118 = arith.addf %114, %117 : vector<2x256xf32>
    %c1_93 = arith.constant 1 : index
    %c1_94 = arith.constant 1 : index
    %119 = memref.load %arg3[%c1_93, %c1_94] : memref<2x49xf32, #tpu.memory_space<smem>>
    %120 = vector.broadcast %119 : f32 to vector<2x256xf32>
    %121 = arith.mulf %120, %37 : vector<2x256xf32>
    %122 = arith.addf %118, %121 : vector<2x256xf32>
    %c0_95 = arith.constant 0 : index
    %c8 = arith.constant 8 : index
    %123 = memref.load %arg3[%c0_95, %c8] : memref<2x49xf32, #tpu.memory_space<smem>>
    %124 = vector.broadcast %123 : f32 to vector<2x256xf32>
    %125 = arith.mulf %124, %38 : vector<2x256xf32>
    %126 = arith.addf %122, %125 : vector<2x256xf32>
    %c1_96 = arith.constant 1 : index
    %c8_97 = arith.constant 8 : index
    %127 = memref.load %arg3[%c1_96, %c8_97] : memref<2x49xf32, #tpu.memory_space<smem>>
    %128 = vector.broadcast %127 : f32 to vector<2x256xf32>
    %129 = arith.mulf %128, %39 : vector<2x256xf32>
    %130 = arith.addf %126, %129 : vector<2x256xf32>
    %c0_98 = arith.constant 0 : index
    %c15 = arith.constant 15 : index
    %131 = memref.load %arg3[%c0_98, %c15] : memref<2x49xf32, #tpu.memory_space<smem>>
    %132 = vector.broadcast %131 : f32 to vector<2x256xf32>
    %133 = arith.mulf %132, %40 : vector<2x256xf32>
    %134 = arith.addf %130, %133 : vector<2x256xf32>
    %c1_99 = arith.constant 1 : index
    %c15_100 = arith.constant 15 : index
    %135 = memref.load %arg3[%c1_99, %c15_100] : memref<2x49xf32, #tpu.memory_space<smem>>
    %136 = vector.broadcast %135 : f32 to vector<2x256xf32>
    %137 = arith.mulf %136, %41 : vector<2x256xf32>
    %138 = arith.addf %134, %137 : vector<2x256xf32>
    %c0_101 = arith.constant 0 : index
    %c22 = arith.constant 22 : index
    %139 = memref.load %arg3[%c0_101, %c22] : memref<2x49xf32, #tpu.memory_space<smem>>
    %140 = vector.broadcast %139 : f32 to vector<2x256xf32>
    %141 = arith.mulf %140, %42 : vector<2x256xf32>
    %142 = arith.addf %138, %141 : vector<2x256xf32>
    %c1_102 = arith.constant 1 : index
    %c22_103 = arith.constant 22 : index
    %143 = memref.load %arg3[%c1_102, %c22_103] : memref<2x49xf32, #tpu.memory_space<smem>>
    %144 = vector.broadcast %143 : f32 to vector<2x256xf32>
    %145 = arith.mulf %144, %43 : vector<2x256xf32>
    %146 = arith.addf %142, %145 : vector<2x256xf32>
    %c0_104 = arith.constant 0 : index
    %c29 = arith.constant 29 : index
    %147 = memref.load %arg3[%c0_104, %c29] : memref<2x49xf32, #tpu.memory_space<smem>>
    %148 = vector.broadcast %147 : f32 to vector<2x256xf32>
    %149 = arith.mulf %148, %44 : vector<2x256xf32>
    %150 = arith.addf %146, %149 : vector<2x256xf32>
    %c1_105 = arith.constant 1 : index
    %c29_106 = arith.constant 29 : index
    %151 = memref.load %arg3[%c1_105, %c29_106] : memref<2x49xf32, #tpu.memory_space<smem>>
    %152 = vector.broadcast %151 : f32 to vector<2x256xf32>
    %153 = arith.mulf %152, %45 : vector<2x256xf32>
    %154 = arith.addf %150, %153 : vector<2x256xf32>
    %c0_107 = arith.constant 0 : index
    %c36 = arith.constant 36 : index
    %155 = memref.load %arg3[%c0_107, %c36] : memref<2x49xf32, #tpu.memory_space<smem>>
    %156 = vector.broadcast %155 : f32 to vector<2x256xf32>
    %157 = arith.mulf %156, %46 : vector<2x256xf32>
    %158 = arith.addf %154, %157 : vector<2x256xf32>
    %c1_108 = arith.constant 1 : index
    %c36_109 = arith.constant 36 : index
    %159 = memref.load %arg3[%c1_108, %c36_109] : memref<2x49xf32, #tpu.memory_space<smem>>
    %160 = vector.broadcast %159 : f32 to vector<2x256xf32>
    %161 = arith.mulf %160, %47 : vector<2x256xf32>
    %162 = arith.addf %158, %161 : vector<2x256xf32>
    %c0_110 = arith.constant 0 : index
    %c43 = arith.constant 43 : index
    %163 = memref.load %arg3[%c0_110, %c43] : memref<2x49xf32, #tpu.memory_space<smem>>
    %164 = vector.broadcast %163 : f32 to vector<2x256xf32>
    %165 = arith.mulf %164, %48 : vector<2x256xf32>
    %166 = arith.addf %162, %165 : vector<2x256xf32>
    %c1_111 = arith.constant 1 : index
    %c43_112 = arith.constant 43 : index
    %167 = memref.load %arg3[%c1_111, %c43_112] : memref<2x49xf32, #tpu.memory_space<smem>>
    %168 = vector.broadcast %167 : f32 to vector<2x256xf32>
    %169 = arith.mulf %168, %49 : vector<2x256xf32>
    %170 = arith.addf %166, %169 : vector<2x256xf32>
    %c0_113 = arith.constant 0 : index
    %c4_114 = arith.constant 4 : index
    %171 = vector.load %arg8[%c0_113, %c4_114] : memref<2x264xf32, #tpu.memory_space<vmem>>, vector<2x256xf32>
    tpu.vector_store %arg8[%c0_113, %c4_114], %170 {strides = array<i32>} : memref<2x264xf32, #tpu.memory_space<vmem>>, vector<2x256xf32>,
    %c0_115 = arith.constant 0 : index
    %c2 = arith.constant 2 : index
    %172 = vector.load %arg8[%c0_115, %c2] : memref<2x264xf32, #tpu.memory_space<vmem>>, vector<2x256xf32>
    %c1_116 = arith.constant 1 : index
    %c0_117 = arith.constant 0 : index
    %173 = vector.load %arg2[%c1_116, %c0_117] : memref<7x256xf32, #tpu.memory_space<vmem>>, vector<1x256xf32>
    %174 = vector.broadcast %173 : vector<1x256xf32> to vector<2x256xf32>
    %175 = arith.mulf %172, %174 : vector<2x256xf32>
    %176 = arith.addf %113, %175 : vector<2x256xf32>
    %cst_118 = arith.constant 0.000000e+00 : f32
    %177 = vector.broadcast %cst_118 : f32 to vector<2x256xf32>
    %c0_119 = arith.constant 0 : index
    %c2_120 = arith.constant 2 : index
    %178 = memref.load %arg3[%c0_119, %c2_120] : memref<2x49xf32, #tpu.memory_space<smem>>
    %179 = vector.broadcast %178 : f32 to vector<2x256xf32>
    %180 = arith.mulf %179, %36 : vector<2x256xf32>
    %181 = arith.addf %177, %180 : vector<2x256xf32>
    %c1_121 = arith.constant 1 : index
    %c2_122 = arith.constant 2 : index
    %182 = memref.load %arg3[%c1_121, %c2_122] : memref<2x49xf32, #tpu.memory_space<smem>>
    %183 = vector.broadcast %182 : f32 to vector<2x256xf32>
    %184 = arith.mulf %183, %37 : vector<2x256xf32>
    %185 = arith.addf %181, %184 : vector<2x256xf32>
    %c0_123 = arith.constant 0 : index
    %c9 = arith.constant 9 : index
    %186 = memref.load %arg3[%c0_123, %c9] : memref<2x49xf32, #tpu.memory_space<smem>>
    %187 = vector.broadcast %186 : f32 to vector<2x256xf32>
    %188 = arith.mulf %187, %38 : vector<2x256xf32>
    %189 = arith.addf %185, %188 : vector<2x256xf32>
    %c1_124 = arith.constant 1 : index
    %c9_125 = arith.constant 9 : index
    %190 = memref.load %arg3[%c1_124, %c9_125] : memref<2x49xf32, #tpu.memory_space<smem>>
    %191 = vector.broadcast %190 : f32 to vector<2x256xf32>
    %192 = arith.mulf %191, %39 : vector<2x256xf32>
    %193 = arith.addf %189, %192 : vector<2x256xf32>
    %c0_126 = arith.constant 0 : index
    %c16 = arith.constant 16 : index
    %194 = memref.load %arg3[%c0_126, %c16] : memref<2x49xf32, #tpu.memory_space<smem>>
    %195 = vector.broadcast %194 : f32 to vector<2x256xf32>
    %196 = arith.mulf %195, %40 : vector<2x256xf32>
    %197 = arith.addf %193, %196 : vector<2x256xf32>
    %c1_127 = arith.constant 1 : index
    %c16_128 = arith.constant 16 : index
    %198 = memref.load %arg3[%c1_127, %c16_128] : memref<2x49xf32, #tpu.memory_space<smem>>
    %199 = vector.broadcast %198 : f32 to vector<2x256xf32>
    %200 = arith.mulf %199, %41 : vector<2x256xf32>
    %201 = arith.addf %197, %200 : vector<2x256xf32>
    %c0_129 = arith.constant 0 : index
    %c23 = arith.constant 23 : index
    %202 = memref.load %arg3[%c0_129, %c23] : memref<2x49xf32, #tpu.memory_space<smem>>
    %203 = vector.broadcast %202 : f32 to vector<2x256xf32>
    %204 = arith.mulf %203, %42 : vector<2x256xf32>
    %205 = arith.addf %201, %204 : vector<2x256xf32>
    %c1_130 = arith.constant 1 : index
    %c23_131 = arith.constant 23 : index
    %206 = memref.load %arg3[%c1_130, %c23_131] : memref<2x49xf32, #tpu.memory_space<smem>>
    %207 = vector.broadcast %206 : f32 to vector<2x256xf32>
    %208 = arith.mulf %207, %43 : vector<2x256xf32>
    %209 = arith.addf %205, %208 : vector<2x256xf32>
    %c0_132 = arith.constant 0 : index
    %c30 = arith.constant 30 : index
    %210 = memref.load %arg3[%c0_132, %c30] : memref<2x49xf32, #tpu.memory_space<smem>>
    %211 = vector.broadcast %210 : f32 to vector<2x256xf32>
    %212 = arith.mulf %211, %44 : vector<2x256xf32>
    %213 = arith.addf %209, %212 : vector<2x256xf32>
    %c1_133 = arith.constant 1 : index
    %c30_134 = arith.constant 30 : index
    %214 = memref.load %arg3[%c1_133, %c30_134] : memref<2x49xf32, #tpu.memory_space<smem>>
    %215 = vector.broadcast %214 : f32 to vector<2x256xf32>
    %216 = arith.mulf %215, %45 : vector<2x256xf32>
    %217 = arith.addf %213, %216 : vector<2x256xf32>
    %c0_135 = arith.constant 0 : index
    %c37 = arith.constant 37 : index
    %218 = memref.load %arg3[%c0_135, %c37] : memref<2x49xf32, #tpu.memory_space<smem>>
    %219 = vector.broadcast %218 : f32 to vector<2x256xf32>
    %220 = arith.mulf %219, %46 : vector<2x256xf32>
    %221 = arith.addf %217, %220 : vector<2x256xf32>
    %c1_136 = arith.constant 1 : index
    %c37_137 = arith.constant 37 : index
    %222 = memref.load %arg3[%c1_136, %c37_137] : memref<2x49xf32, #tpu.memory_space<smem>>
    %223 = vector.broadcast %222 : f32 to vector<2x256xf32>
    %224 = arith.mulf %223, %47 : vector<2x256xf32>
    %225 = arith.addf %221, %224 : vector<2x256xf32>
    %c0_138 = arith.constant 0 : index
    %c44 = arith.constant 44 : index
    %226 = memref.load %arg3[%c0_138, %c44] : memref<2x49xf32, #tpu.memory_space<smem>>
    %227 = vector.broadcast %226 : f32 to vector<2x256xf32>
    %228 = arith.mulf %227, %48 : vector<2x256xf32>
    %229 = arith.addf %225, %228 : vector<2x256xf32>
    %c1_139 = arith.constant 1 : index
    %c44_140 = arith.constant 44 : index
    %230 = memref.load %arg3[%c1_139, %c44_140] : memref<2x49xf32, #tpu.memory_space<smem>>
    %231 = vector.broadcast %230 : f32 to vector<2x256xf32>
    %232 = arith.mulf %231, %49 : vector<2x256xf32>
    %233 = arith.addf %229, %232 : vector<2x256xf32>
    %c0_141 = arith.constant 0 : index
    %c4_142 = arith.constant 4 : index
    %234 = vector.load %arg8[%c0_141, %c4_142] : memref<2x264xf32, #tpu.memory_space<vmem>>, vector<2x256xf32>
    tpu.vector_store %arg8[%c0_141, %c4_142], %233 {strides = array<i32>} : memref<2x264xf32, #tpu.memory_space<vmem>>, vector<2x256xf32>,
    %c0_143 = arith.constant 0 : index
    %c3_144 = arith.constant 3 : index
    %235 = vector.load %arg8[%c0_143, %c3_144] : memref<2x264xf32, #tpu.memory_space<vmem>>, vector<2x256xf32>
    %c2_145 = arith.constant 2 : index
    %c0_146 = arith.constant 0 : index
    %236 = vector.load %arg2[%c2_145, %c0_146] : memref<7x256xf32, #tpu.memory_space<vmem>>, vector<1x256xf32>
    %237 = vector.broadcast %236 : vector<1x256xf32> to vector<2x256xf32>
    %238 = arith.mulf %235, %237 : vector<2x256xf32>
    %239 = arith.addf %176, %238 : vector<2x256xf32>
    %cst_147 = arith.constant 0.000000e+00 : f32
    %240 = vector.broadcast %cst_147 : f32 to vector<2x256xf32>
    %c0_148 = arith.constant 0 : index
    %c3_149 = arith.constant 3 : index
    %241 = memref.load %arg3[%c0_148, %c3_149] : memref<2x49xf32, #tpu.memory_space<smem>>
    %242 = vector.broadcast %241 : f32 to vector<2x256xf32>
    %243 = arith.mulf %242, %36 : vector<2x256xf32>
    %244 = arith.addf %240, %243 : vector<2x256xf32>
    %c1_150 = arith.constant 1 : index
    %c3_151 = arith.constant 3 : index
    %245 = memref.load %arg3[%c1_150, %c3_151] : memref<2x49xf32, #tpu.memory_space<smem>>
    %246 = vector.broadcast %245 : f32 to vector<2x256xf32>
    %247 = arith.mulf %246, %37 : vector<2x256xf32>
    %248 = arith.addf %244, %247 : vector<2x256xf32>
    %c0_152 = arith.constant 0 : index
    %c10 = arith.constant 10 : index
    %249 = memref.load %arg3[%c0_152, %c10] : memref<2x49xf32, #tpu.memory_space<smem>>
    %250 = vector.broadcast %249 : f32 to vector<2x256xf32>
    %251 = arith.mulf %250, %38 : vector<2x256xf32>
    %252 = arith.addf %248, %251 : vector<2x256xf32>
    %c1_153 = arith.constant 1 : index
    %c10_154 = arith.constant 10 : index
    %253 = memref.load %arg3[%c1_153, %c10_154] : memref<2x49xf32, #tpu.memory_space<smem>>
    %254 = vector.broadcast %253 : f32 to vector<2x256xf32>
    %255 = arith.mulf %254, %39 : vector<2x256xf32>
    %256 = arith.addf %252, %255 : vector<2x256xf32>
    %c0_155 = arith.constant 0 : index
    %c17 = arith.constant 17 : index
    %257 = memref.load %arg3[%c0_155, %c17] : memref<2x49xf32, #tpu.memory_space<smem>>
    %258 = vector.broadcast %257 : f32 to vector<2x256xf32>
    %259 = arith.mulf %258, %40 : vector<2x256xf32>
    %260 = arith.addf %256, %259 : vector<2x256xf32>
    %c1_156 = arith.constant 1 : index
    %c17_157 = arith.constant 17 : index
    %261 = memref.load %arg3[%c1_156, %c17_157] : memref<2x49xf32, #tpu.memory_space<smem>>
    %262 = vector.broadcast %261 : f32 to vector<2x256xf32>
    %263 = arith.mulf %262, %41 : vector<2x256xf32>
    %264 = arith.addf %260, %263 : vector<2x256xf32>
    %c0_158 = arith.constant 0 : index
    %c24 = arith.constant 24 : index
    %265 = memref.load %arg3[%c0_158, %c24] : memref<2x49xf32, #tpu.memory_space<smem>>
    %266 = vector.broadcast %265 : f32 to vector<2x256xf32>
    %267 = arith.mulf %266, %42 : vector<2x256xf32>
    %268 = arith.addf %264, %267 : vector<2x256xf32>
    %c1_159 = arith.constant 1 : index
    %c24_160 = arith.constant 24 : index
    %269 = memref.load %arg3[%c1_159, %c24_160] : memref<2x49xf32, #tpu.memory_space<smem>>
    %270 = vector.broadcast %269 : f32 to vector<2x256xf32>
    %271 = arith.mulf %270, %43 : vector<2x256xf32>
    %272 = arith.addf %268, %271 : vector<2x256xf32>
    %c0_161 = arith.constant 0 : index
    %c31 = arith.constant 31 : index
    %273 = memref.load %arg3[%c0_161, %c31] : memref<2x49xf32, #tpu.memory_space<smem>>
    %274 = vector.broadcast %273 : f32 to vector<2x256xf32>
    %275 = arith.mulf %274, %44 : vector<2x256xf32>
    %276 = arith.addf %272, %275 : vector<2x256xf32>
    %c1_162 = arith.constant 1 : index
    %c31_163 = arith.constant 31 : index
    %277 = memref.load %arg3[%c1_162, %c31_163] : memref<2x49xf32, #tpu.memory_space<smem>>
    %278 = vector.broadcast %277 : f32 to vector<2x256xf32>
    %279 = arith.mulf %278, %45 : vector<2x256xf32>
    %280 = arith.addf %276, %279 : vector<2x256xf32>
    %c0_164 = arith.constant 0 : index
    %c38 = arith.constant 38 : index
    %281 = memref.load %arg3[%c0_164, %c38] : memref<2x49xf32, #tpu.memory_space<smem>>
    %282 = vector.broadcast %281 : f32 to vector<2x256xf32>
    %283 = arith.mulf %282, %46 : vector<2x256xf32>
    %284 = arith.addf %280, %283 : vector<2x256xf32>
    %c1_165 = arith.constant 1 : index
    %c38_166 = arith.constant 38 : index
    %285 = memref.load %arg3[%c1_165, %c38_166] : memref<2x49xf32, #tpu.memory_space<smem>>
    %286 = vector.broadcast %285 : f32 to vector<2x256xf32>
    %287 = arith.mulf %286, %47 : vector<2x256xf32>
    %288 = arith.addf %284, %287 : vector<2x256xf32>
    %c0_167 = arith.constant 0 : index
    %c45 = arith.constant 45 : index
    %289 = memref.load %arg3[%c0_167, %c45] : memref<2x49xf32, #tpu.memory_space<smem>>
    %290 = vector.broadcast %289 : f32 to vector<2x256xf32>
    %291 = arith.mulf %290, %48 : vector<2x256xf32>
    %292 = arith.addf %288, %291 : vector<2x256xf32>
    %c1_168 = arith.constant 1 : index
    %c45_169 = arith.constant 45 : index
    %293 = memref.load %arg3[%c1_168, %c45_169] : memref<2x49xf32, #tpu.memory_space<smem>>
    %294 = vector.broadcast %293 : f32 to vector<2x256xf32>
    %295 = arith.mulf %294, %49 : vector<2x256xf32>
    %296 = arith.addf %292, %295 : vector<2x256xf32>
    %297 = arith.addf %239, %296 : vector<2x256xf32>
    %cst_170 = arith.constant 0.000000e+00 : f32
    %298 = vector.broadcast %cst_170 : f32 to vector<2x256xf32>
    %c0_171 = arith.constant 0 : index
    %c4_172 = arith.constant 4 : index
    %299 = memref.load %arg3[%c0_171, %c4_172] : memref<2x49xf32, #tpu.memory_space<smem>>
    %300 = vector.broadcast %299 : f32 to vector<2x256xf32>
    %301 = arith.mulf %300, %36 : vector<2x256xf32>
    %302 = arith.addf %298, %301 : vector<2x256xf32>
    %c1_173 = arith.constant 1 : index
    %c4_174 = arith.constant 4 : index
    %303 = memref.load %arg3[%c1_173, %c4_174] : memref<2x49xf32, #tpu.memory_space<smem>>
    %304 = vector.broadcast %303 : f32 to vector<2x256xf32>
    %305 = arith.mulf %304, %37 : vector<2x256xf32>
    %306 = arith.addf %302, %305 : vector<2x256xf32>
    %c0_175 = arith.constant 0 : index
    %c11 = arith.constant 11 : index
    %307 = memref.load %arg3[%c0_175, %c11] : memref<2x49xf32, #tpu.memory_space<smem>>
    %308 = vector.broadcast %307 : f32 to vector<2x256xf32>
    %309 = arith.mulf %308, %38 : vector<2x256xf32>
    %310 = arith.addf %306, %309 : vector<2x256xf32>
    %c1_176 = arith.constant 1 : index
    %c11_177 = arith.constant 11 : index
    %311 = memref.load %arg3[%c1_176, %c11_177] : memref<2x49xf32, #tpu.memory_space<smem>>
    %312 = vector.broadcast %311 : f32 to vector<2x256xf32>
    %313 = arith.mulf %312, %39 : vector<2x256xf32>
    %314 = arith.addf %310, %313 : vector<2x256xf32>
    %c0_178 = arith.constant 0 : index
    %c18 = arith.constant 18 : index
    %315 = memref.load %arg3[%c0_178, %c18] : memref<2x49xf32, #tpu.memory_space<smem>>
    %316 = vector.broadcast %315 : f32 to vector<2x256xf32>
    %317 = arith.mulf %316, %40 : vector<2x256xf32>
    %318 = arith.addf %314, %317 : vector<2x256xf32>
    %c1_179 = arith.constant 1 : index
    %c18_180 = arith.constant 18 : index
    %319 = memref.load %arg3[%c1_179, %c18_180] : memref<2x49xf32, #tpu.memory_space<smem>>
    %320 = vector.broadcast %319 : f32 to vector<2x256xf32>
    %321 = arith.mulf %320, %41 : vector<2x256xf32>
    %322 = arith.addf %318, %321 : vector<2x256xf32>
    %c0_181 = arith.constant 0 : index
    %c25 = arith.constant 25 : index
    %323 = memref.load %arg3[%c0_181, %c25] : memref<2x49xf32, #tpu.memory_space<smem>>
    %324 = vector.broadcast %323 : f32 to vector<2x256xf32>
    %325 = arith.mulf %324, %42 : vector<2x256xf32>
    %326 = arith.addf %322, %325 : vector<2x256xf32>
    %c1_182 = arith.constant 1 : index
    %c25_183 = arith.constant 25 : index
    %327 = memref.load %arg3[%c1_182, %c25_183] : memref<2x49xf32, #tpu.memory_space<smem>>
    %328 = vector.broadcast %327 : f32 to vector<2x256xf32>
    %329 = arith.mulf %328, %43 : vector<2x256xf32>
    %330 = arith.addf %326, %329 : vector<2x256xf32>
    %c0_184 = arith.constant 0 : index
    %c32 = arith.constant 32 : index
    %331 = memref.load %arg3[%c0_184, %c32] : memref<2x49xf32, #tpu.memory_space<smem>>
    %332 = vector.broadcast %331 : f32 to vector<2x256xf32>
    %333 = arith.mulf %332, %44 : vector<2x256xf32>
    %334 = arith.addf %330, %333 : vector<2x256xf32>
    %c1_185 = arith.constant 1 : index
    %c32_186 = arith.constant 32 : index
    %335 = memref.load %arg3[%c1_185, %c32_186] : memref<2x49xf32, #tpu.memory_space<smem>>
    %336 = vector.broadcast %335 : f32 to vector<2x256xf32>
    %337 = arith.mulf %336, %45 : vector<2x256xf32>
    %338 = arith.addf %334, %337 : vector<2x256xf32>
    %c0_187 = arith.constant 0 : index
    %c39 = arith.constant 39 : index
    %339 = memref.load %arg3[%c0_187, %c39] : memref<2x49xf32, #tpu.memory_space<smem>>
    %340 = vector.broadcast %339 : f32 to vector<2x256xf32>
    %341 = arith.mulf %340, %46 : vector<2x256xf32>
    %342 = arith.addf %338, %341 : vector<2x256xf32>
    %c1_188 = arith.constant 1 : index
    %c39_189 = arith.constant 39 : index
    %343 = memref.load %arg3[%c1_188, %c39_189] : memref<2x49xf32, #tpu.memory_space<smem>>
    %344 = vector.broadcast %343 : f32 to vector<2x256xf32>
    %345 = arith.mulf %344, %47 : vector<2x256xf32>
    %346 = arith.addf %342, %345 : vector<2x256xf32>
    %c0_190 = arith.constant 0 : index
    %c46 = arith.constant 46 : index
    %347 = memref.load %arg3[%c0_190, %c46] : memref<2x49xf32, #tpu.memory_space<smem>>
    %348 = vector.broadcast %347 : f32 to vector<2x256xf32>
    %349 = arith.mulf %348, %48 : vector<2x256xf32>
    %350 = arith.addf %346, %349 : vector<2x256xf32>
    %c1_191 = arith.constant 1 : index
    %c46_192 = arith.constant 46 : index
    %351 = memref.load %arg3[%c1_191, %c46_192] : memref<2x49xf32, #tpu.memory_space<smem>>
    %352 = vector.broadcast %351 : f32 to vector<2x256xf32>
    %353 = arith.mulf %352, %49 : vector<2x256xf32>
    %354 = arith.addf %350, %353 : vector<2x256xf32>
    %c0_193 = arith.constant 0 : index
    %c4_194 = arith.constant 4 : index
    %355 = vector.load %arg8[%c0_193, %c4_194] : memref<2x264xf32, #tpu.memory_space<vmem>>, vector<2x256xf32>
    tpu.vector_store %arg8[%c0_193, %c4_194], %354 {strides = array<i32>} : memref<2x264xf32, #tpu.memory_space<vmem>>, vector<2x256xf32>,
    %c0_195 = arith.constant 0 : index
    %c5 = arith.constant 5 : index
    %356 = vector.load %arg8[%c0_195, %c5] : memref<2x264xf32, #tpu.memory_space<vmem>>, vector<2x256xf32>
    %c4_196 = arith.constant 4 : index
    %c0_197 = arith.constant 0 : index
    %357 = vector.load %arg2[%c4_196, %c0_197] : memref<7x256xf32, #tpu.memory_space<vmem>>, vector<1x256xf32>
    %358 = vector.broadcast %357 : vector<1x256xf32> to vector<2x256xf32>
    %359 = arith.mulf %356, %358 : vector<2x256xf32>
    %360 = arith.addf %297, %359 : vector<2x256xf32>
    %cst_198 = arith.constant 0.000000e+00 : f32
    %361 = vector.broadcast %cst_198 : f32 to vector<2x256xf32>
    %c0_199 = arith.constant 0 : index
    %c5_200 = arith.constant 5 : index
    %362 = memref.load %arg3[%c0_199, %c5_200] : memref<2x49xf32, #tpu.memory_space<smem>>
    %363 = vector.broadcast %362 : f32 to vector<2x256xf32>
    %364 = arith.mulf %363, %36 : vector<2x256xf32>
    %365 = arith.addf %361, %364 : vector<2x256xf32>
    %c1_201 = arith.constant 1 : index
    %c5_202 = arith.constant 5 : index
    %366 = memref.load %arg3[%c1_201, %c5_202] : memref<2x49xf32, #tpu.memory_space<smem>>
    %367 = vector.broadcast %366 : f32 to vector<2x256xf32>
    %368 = arith.mulf %367, %37 : vector<2x256xf32>
    %369 = arith.addf %365, %368 : vector<2x256xf32>
    %c0_203 = arith.constant 0 : index
    %c12 = arith.constant 12 : index
    %370 = memref.load %arg3[%c0_203, %c12] : memref<2x49xf32, #tpu.memory_space<smem>>
    %371 = vector.broadcast %370 : f32 to vector<2x256xf32>
    %372 = arith.mulf %371, %38 : vector<2x256xf32>
    %373 = arith.addf %369, %372 : vector<2x256xf32>
    %c1_204 = arith.constant 1 : index
    %c12_205 = arith.constant 12 : index
    %374 = memref.load %arg3[%c1_204, %c12_205] : memref<2x49xf32, #tpu.memory_space<smem>>
    %375 = vector.broadcast %374 : f32 to vector<2x256xf32>
    %376 = arith.mulf %375, %39 : vector<2x256xf32>
    %377 = arith.addf %373, %376 : vector<2x256xf32>
    %c0_206 = arith.constant 0 : index
    %c19_207 = arith.constant 19 : index
    %378 = memref.load %arg3[%c0_206, %c19_207] : memref<2x49xf32, #tpu.memory_space<smem>>
    %379 = vector.broadcast %378 : f32 to vector<2x256xf32>
    %380 = arith.mulf %379, %40 : vector<2x256xf32>
    %381 = arith.addf %377, %380 : vector<2x256xf32>
    %c1_208 = arith.constant 1 : index
    %c19_209 = arith.constant 19 : index
    %382 = memref.load %arg3[%c1_208, %c19_209] : memref<2x49xf32, #tpu.memory_space<smem>>
    %383 = vector.broadcast %382 : f32 to vector<2x256xf32>
    %384 = arith.mulf %383, %41 : vector<2x256xf32>
    %385 = arith.addf %381, %384 : vector<2x256xf32>
    %c0_210 = arith.constant 0 : index
    %c26 = arith.constant 26 : index
    %386 = memref.load %arg3[%c0_210, %c26] : memref<2x49xf32, #tpu.memory_space<smem>>
    %387 = vector.broadcast %386 : f32 to vector<2x256xf32>
    %388 = arith.mulf %387, %42 : vector<2x256xf32>
    %389 = arith.addf %385, %388 : vector<2x256xf32>
    %c1_211 = arith.constant 1 : index
    %c26_212 = arith.constant 26 : index
    %390 = memref.load %arg3[%c1_211, %c26_212] : memref<2x49xf32, #tpu.memory_space<smem>>
    %391 = vector.broadcast %390 : f32 to vector<2x256xf32>
    %392 = arith.mulf %391, %43 : vector<2x256xf32>
    %393 = arith.addf %389, %392 : vector<2x256xf32>
    %c0_213 = arith.constant 0 : index
    %c33 = arith.constant 33 : index
    %394 = memref.load %arg3[%c0_213, %c33] : memref<2x49xf32, #tpu.memory_space<smem>>
    %395 = vector.broadcast %394 : f32 to vector<2x256xf32>
    %396 = arith.mulf %395, %44 : vector<2x256xf32>
    %397 = arith.addf %393, %396 : vector<2x256xf32>
    %c1_214 = arith.constant 1 : index
    %c33_215 = arith.constant 33 : index
    %398 = memref.load %arg3[%c1_214, %c33_215] : memref<2x49xf32, #tpu.memory_space<smem>>
    %399 = vector.broadcast %398 : f32 to vector<2x256xf32>
    %400 = arith.mulf %399, %45 : vector<2x256xf32>
    %401 = arith.addf %397, %400 : vector<2x256xf32>
    %c0_216 = arith.constant 0 : index
    %c40 = arith.constant 40 : index
    %402 = memref.load %arg3[%c0_216, %c40] : memref<2x49xf32, #tpu.memory_space<smem>>
    %403 = vector.broadcast %402 : f32 to vector<2x256xf32>
    %404 = arith.mulf %403, %46 : vector<2x256xf32>
    %405 = arith.addf %401, %404 : vector<2x256xf32>
    %c1_217 = arith.constant 1 : index
    %c40_218 = arith.constant 40 : index
    %406 = memref.load %arg3[%c1_217, %c40_218] : memref<2x49xf32, #tpu.memory_space<smem>>
    %407 = vector.broadcast %406 : f32 to vector<2x256xf32>
    %408 = arith.mulf %407, %47 : vector<2x256xf32>
    %409 = arith.addf %405, %408 : vector<2x256xf32>
    %c0_219 = arith.constant 0 : index
    %c47 = arith.constant 47 : index
    %410 = memref.load %arg3[%c0_219, %c47] : memref<2x49xf32, #tpu.memory_space<smem>>
    %411 = vector.broadcast %410 : f32 to vector<2x256xf32>
    %412 = arith.mulf %411, %48 : vector<2x256xf32>
    %413 = arith.addf %409, %412 : vector<2x256xf32>
    %c1_220 = arith.constant 1 : index
    %c47_221 = arith.constant 47 : index
    %414 = memref.load %arg3[%c1_220, %c47_221] : memref<2x49xf32, #tpu.memory_space<smem>>
    %415 = vector.broadcast %414 : f32 to vector<2x256xf32>
    %416 = arith.mulf %415, %49 : vector<2x256xf32>
    %417 = arith.addf %413, %416 : vector<2x256xf32>
    %c0_222 = arith.constant 0 : index
    %c4_223 = arith.constant 4 : index
    %418 = vector.load %arg8[%c0_222, %c4_223] : memref<2x264xf32, #tpu.memory_space<vmem>>, vector<2x256xf32>
    tpu.vector_store %arg8[%c0_222, %c4_223], %417 {strides = array<i32>} : memref<2x264xf32, #tpu.memory_space<vmem>>, vector<2x256xf32>,
    %c0_224 = arith.constant 0 : index
    %c6 = arith.constant 6 : index
    %419 = vector.load %arg8[%c0_224, %c6] : memref<2x264xf32, #tpu.memory_space<vmem>>, vector<2x256xf32>
    %c5_225 = arith.constant 5 : index
    %c0_226 = arith.constant 0 : index
    %420 = vector.load %arg2[%c5_225, %c0_226] : memref<7x256xf32, #tpu.memory_space<vmem>>, vector<1x256xf32>
    %421 = vector.broadcast %420 : vector<1x256xf32> to vector<2x256xf32>
    %422 = arith.mulf %419, %421 : vector<2x256xf32>
    %423 = arith.addf %360, %422 : vector<2x256xf32>
    %cst_227 = arith.constant 0.000000e+00 : f32
    %424 = vector.broadcast %cst_227 : f32 to vector<2x256xf32>
    %c0_228 = arith.constant 0 : index
    %c6_229 = arith.constant 6 : index
    %425 = memref.load %arg3[%c0_228, %c6_229] : memref<2x49xf32, #tpu.memory_space<smem>>
    %426 = vector.broadcast %425 : f32 to vector<2x256xf32>
    %427 = arith.mulf %426, %36 : vector<2x256xf32>
    %428 = arith.addf %424, %427 : vector<2x256xf32>
    %c1_230 = arith.constant 1 : index
    %c6_231 = arith.constant 6 : index
    %429 = memref.load %arg3[%c1_230, %c6_231] : memref<2x49xf32, #tpu.memory_space<smem>>
    %430 = vector.broadcast %429 : f32 to vector<2x256xf32>
    %431 = arith.mulf %430, %37 : vector<2x256xf32>
    %432 = arith.addf %428, %431 : vector<2x256xf32>
    %c0_232 = arith.constant 0 : index
    %c13 = arith.constant 13 : index
    %433 = memref.load %arg3[%c0_232, %c13] : memref<2x49xf32, #tpu.memory_space<smem>>
    %434 = vector.broadcast %433 : f32 to vector<2x256xf32>
    %435 = arith.mulf %434, %38 : vector<2x256xf32>
    %436 = arith.addf %432, %435 : vector<2x256xf32>
    %c1_233 = arith.constant 1 : index
    %c13_234 = arith.constant 13 : index
    %437 = memref.load %arg3[%c1_233, %c13_234] : memref<2x49xf32, #tpu.memory_space<smem>>
    %438 = vector.broadcast %437 : f32 to vector<2x256xf32>
    %439 = arith.mulf %438, %39 : vector<2x256xf32>
    %440 = arith.addf %436, %439 : vector<2x256xf32>
    %c0_235 = arith.constant 0 : index
    %c20 = arith.constant 20 : index
    %441 = memref.load %arg3[%c0_235, %c20] : memref<2x49xf32, #tpu.memory_space<smem>>
    %442 = vector.broadcast %441 : f32 to vector<2x256xf32>
    %443 = arith.mulf %442, %40 : vector<2x256xf32>
    %444 = arith.addf %440, %443 : vector<2x256xf32>
    %c1_236 = arith.constant 1 : index
    %c20_237 = arith.constant 20 : index
    %445 = memref.load %arg3[%c1_236, %c20_237] : memref<2x49xf32, #tpu.memory_space<smem>>
    %446 = vector.broadcast %445 : f32 to vector<2x256xf32>
    %447 = arith.mulf %446, %41 : vector<2x256xf32>
    %448 = arith.addf %444, %447 : vector<2x256xf32>
    %c0_238 = arith.constant 0 : index
    %c27 = arith.constant 27 : index
    %449 = memref.load %arg3[%c0_238, %c27] : memref<2x49xf32, #tpu.memory_space<smem>>
    %450 = vector.broadcast %449 : f32 to vector<2x256xf32>
    %451 = arith.mulf %450, %42 : vector<2x256xf32>
    %452 = arith.addf %448, %451 : vector<2x256xf32>
    %c1_239 = arith.constant 1 : index
    %c27_240 = arith.constant 27 : index
    %453 = memref.load %arg3[%c1_239, %c27_240] : memref<2x49xf32, #tpu.memory_space<smem>>
    %454 = vector.broadcast %453 : f32 to vector<2x256xf32>
    %455 = arith.mulf %454, %43 : vector<2x256xf32>
    %456 = arith.addf %452, %455 : vector<2x256xf32>
    %c0_241 = arith.constant 0 : index
    %c34 = arith.constant 34 : index
    %457 = memref.load %arg3[%c0_241, %c34] : memref<2x49xf32, #tpu.memory_space<smem>>
    %458 = vector.broadcast %457 : f32 to vector<2x256xf32>
    %459 = arith.mulf %458, %44 : vector<2x256xf32>
    %460 = arith.addf %456, %459 : vector<2x256xf32>
    %c1_242 = arith.constant 1 : index
    %c34_243 = arith.constant 34 : index
    %461 = memref.load %arg3[%c1_242, %c34_243] : memref<2x49xf32, #tpu.memory_space<smem>>
    %462 = vector.broadcast %461 : f32 to vector<2x256xf32>
    %463 = arith.mulf %462, %45 : vector<2x256xf32>
    %464 = arith.addf %460, %463 : vector<2x256xf32>
    %c0_244 = arith.constant 0 : index
    %c41 = arith.constant 41 : index
    %465 = memref.load %arg3[%c0_244, %c41] : memref<2x49xf32, #tpu.memory_space<smem>>
    %466 = vector.broadcast %465 : f32 to vector<2x256xf32>
    %467 = arith.mulf %466, %46 : vector<2x256xf32>
    %468 = arith.addf %464, %467 : vector<2x256xf32>
    %c1_245 = arith.constant 1 : index
    %c41_246 = arith.constant 41 : index
    %469 = memref.load %arg3[%c1_245, %c41_246] : memref<2x49xf32, #tpu.memory_space<smem>>
    %470 = vector.broadcast %469 : f32 to vector<2x256xf32>
    %471 = arith.mulf %470, %47 : vector<2x256xf32>
    %472 = arith.addf %468, %471 : vector<2x256xf32>
    %c0_247 = arith.constant 0 : index
    %c48 = arith.constant 48 : index
    %473 = memref.load %arg3[%c0_247, %c48] : memref<2x49xf32, #tpu.memory_space<smem>>
    %474 = vector.broadcast %473 : f32 to vector<2x256xf32>
    %475 = arith.mulf %474, %48 : vector<2x256xf32>
    %476 = arith.addf %472, %475 : vector<2x256xf32>
    %c1_248 = arith.constant 1 : index
    %c48_249 = arith.constant 48 : index
    %477 = memref.load %arg3[%c1_248, %c48_249] : memref<2x49xf32, #tpu.memory_space<smem>>
    %478 = vector.broadcast %477 : f32 to vector<2x256xf32>
    %479 = arith.mulf %478, %49 : vector<2x256xf32>
    %480 = arith.addf %476, %479 : vector<2x256xf32>
    %c0_250 = arith.constant 0 : index
    %c4_251 = arith.constant 4 : index
    %481 = vector.load %arg8[%c0_250, %c4_251] : memref<2x264xf32, #tpu.memory_space<vmem>>, vector<2x256xf32>
    tpu.vector_store %arg8[%c0_250, %c4_251], %480 {strides = array<i32>} : memref<2x264xf32, #tpu.memory_space<vmem>>, vector<2x256xf32>,
    %c0_252 = arith.constant 0 : index
    %c7_253 = arith.constant 7 : index
    %482 = vector.load %arg8[%c0_252, %c7_253] : memref<2x264xf32, #tpu.memory_space<vmem>>, vector<2x256xf32>
    %c6_254 = arith.constant 6 : index
    %c0_255 = arith.constant 0 : index
    %483 = vector.load %arg2[%c6_254, %c0_255] : memref<7x256xf32, #tpu.memory_space<vmem>>, vector<1x256xf32>
    %484 = vector.broadcast %483 : vector<1x256xf32> to vector<2x256xf32>
    %485 = arith.mulf %482, %484 : vector<2x256xf32>
    %486 = arith.addf %423, %485 : vector<2x256xf32>
    %c0_256 = arith.constant 0 : index
    %487 = memref.load %arg4[%c0_256] : memref<1xf32, #tpu.memory_space<smem>>
    %488 = vector.broadcast %487 : f32 to vector<2x256xf32>
    %489 = arith.addf %486, %488 : vector<2x256xf32>
    %490 = arith.negf %489 : vector<2x256xf32>
    %491 = math.exp %490 : vector<2x256xf32>
    %cst_257 = arith.constant 1.000000e+00 : f32
    %492 = vector.broadcast %cst_257 : f32 to vector<2x256xf32>
    %493 = arith.addf %492, %491 : vector<2x256xf32>
    %494 = arith.divf %492, %493 : vector<2x256xf32>
    %c0_258 = arith.constant 0 : index
    %c0_259 = arith.constant 0 : index
    %c0_260 = arith.constant 0 : index
    %495 = vector.load %arg1[%c0_258, %c0_259, %c0_260] : memref<2x4x256xf32, #tpu.memory_space<vmem>>, vector<1x4x256xf32>
    %496 = vector.shape_cast %495 : vector<1x4x256xf32> to vector<4x256xf32>
    %497 = vector.extract_strided_slice %494 {offsets = [0, 0], sizes = [1, 256], strides = [1, 1]} : vector<2x256xf32> to vector<1x256xf32>
    %498 = vector.broadcast %497 : vector<1x256xf32> to vector<4x256xf32>
    %499 = arith.mulf %496, %498 : vector<4x256xf32>
    %c0_261 = arith.constant 0 : index
    %c0_262 = arith.constant 0 : index
    %c0_263 = arith.constant 0 : index
    %500 = vector.load %arg5[%c0_261, %c0_262, %c0_263] : memref<2x4x256xf32, #tpu.memory_space<vmem>>, vector<1x4x256xf32>
    %501 = vector.shape_cast %500 : vector<1x4x256xf32> to vector<4x256xf32>
    %502 = vector.shape_cast %499 : vector<4x256xf32> to vector<1x4x256xf32>
    tpu.vector_store %arg5[%c0_261, %c0_262, %c0_263], %502 {strides = array<i32>} : memref<2x4x256xf32, #tpu.memory_space<vmem>>, vector<1x4x256xf32>,
    %c1_264 = arith.constant 1 : index
    %c0_265 = arith.constant 0 : index
    %c0_266 = arith.constant 0 : index
    %503 = vector.load %arg1[%c1_264, %c0_265, %c0_266] : memref<2x4x256xf32, #tpu.memory_space<vmem>>, vector<1x4x256xf32>
    %504 = vector.shape_cast %503 : vector<1x4x256xf32> to vector<4x256xf32>
    %505 = vector.extract_strided_slice %494 {offsets = [1, 0], sizes = [1, 256], strides = [1, 1]} : vector<2x256xf32> to vector<1x256xf32>
    %506 = vector.broadcast %505 : vector<1x256xf32> to vector<4x256xf32>
    %507 = arith.mulf %504, %506 : vector<4x256xf32>
    %c1_267 = arith.constant 1 : index
    %c0_268 = arith.constant 0 : index
    %c0_269 = arith.constant 0 : index
    %508 = vector.load %arg5[%c1_267, %c0_268, %c0_269] : memref<2x4x256xf32, #tpu.memory_space<vmem>>, vector<1x4x256xf32>
    %509 = vector.shape_cast %508 : vector<1x4x256xf32> to vector<4x256xf32>
    %510 = vector.shape_cast %507 : vector<4x256xf32> to vector<1x4x256xf32>
    tpu.vector_store %arg5[%c1_267, %c0_268, %c0_269], %510 {strides = array<i32>} : memref<2x4x256xf32, #tpu.memory_space<vmem>>, vector<1x4x256xf32>,
    return
  }
  func.func @transform_0(%arg0: i32) -> (i32, i32, i32) {
    %c0_i32 = arith.constant 0 : i32
    %c0_i32_0 = arith.constant 0 : i32
    %c0_i32_1 = arith.constant 0 : i32
    return %arg0, %c0_i32, %c0_i32_0 : i32, i32, i32
  }
  func.func @transform_1(%arg0: i32) -> (i32, i32) {
    %c0_i32 = arith.constant 0 : i32
    %c0_i32_0 = arith.constant 0 : i32
    %c0_i32_1 = arith.constant 0 : i32
    return %c0_i32, %c0_i32_0 : i32, i32
  }
  func.func @transform_2(%arg0: i32) -> (i32, i32) {
    %c0_i32 = arith.constant 0 : i32
    %c0_i32_0 = arith.constant 0 : i32
    %c0_i32_1 = arith.constant 0 : i32
    return %c0_i32, %c0_i32_0 : i32, i32
  }
  func.func @transform_3(%arg0: i32) -> i32 {
    %c0_i32 = arith.constant 0 : i32
    %c0_i32_0 = arith.constant 0 : i32
    return %c0_i32 : i32
  }
  func.func @transform_4(%arg0: i32) -> (i32, i32, i32) {
    %c0_i32 = arith.constant 0 : i32
    %c0_i32_0 = arith.constant 0 : i32
    %c0_i32_1 = arith.constant 0 : i32
    return %arg0, %c0_i32, %c0_i32_0 : i32, i32, i32
  }
}

</mosaic_0001>

<llo_original>
// kernel: tpu_custom_call.1
$region0: #{tpu_custom_call.1}
  #allocation0 [shape = 'u32[]', space=smem, size = 0x4, offset = 0x4, fixed_abs, tag = 'smem constant byte address 0x4 - core index']
  #allocation1 [shape = 'u32[144,128]{1,0:T(1,128)}', space=vmem, size = 0x12000, scoped, tag = 'internal scratch']
  #allocation2 [shape = 'f32[2,358]{1,0:T(2,128)}', space=vmem, size = 0xc00, scoped, tag = 'scratch operand']
  #allocation3 [shape = 'f32[2,358]{1,0:T(2,128)}', space=vmem, size = 0xc00, scoped, tag = 'scratch operand']
  #allocation4 [shape = 'f32[2,264]{1,0:T(2,128)}', space=vmem, size = 0xc00, scoped, tag = 'scratch operand']
  #allocation5 [shape = 'f32[1]{0:T(128)S(6)}', space=smem, size = 0x200, scoped, tag = 'scoped memory for tpu_custom_call.1']
  %s0 = inlined_call_operand.hbm [shape: f32[2,4,256], index: 0, kind: input, shape index: {}]
  %s1 = inlined_call_operand.hbm [shape: f32[7,256], index: 1, kind: input, shape index: {}]
  %s2 = inlined_call_operand.vmem [shape: f32[2,49], index: 2, kind: input, shape index: {}]
  %s3 = inlined_call_operand.<no memory space> [shape: f32[1], index: 3, kind: input, shape index: {}]
  %s4 = inlined_call_operand.hbm [shape: f32[2,4,256], index: 4, kind: output, shape index: {}]
  %s5 = sld [smem:[#allocation0]]
  $region38: #{tpu_custom_call.1} parent=0
    _
  %s7 = ssub.s32 1, %s5
  %s8 = scalar_select 0, %s7, %s5
  %9 = sst [smem:[#allocation5]] %s3
  $region1: #{tpu_custom_call.1} parent=0
    #allocation6 [shape = 'u8[8192]{0}', space=vmem, size = 0x2000, scoped, tag = 'input window, operand 0, single buffered']
    #allocation7 [shape = 's32[1]{0}', space=sflag, size = 0x4, scoped, tag = 'scoped memory for tpu_custom_call.1']
    #allocation8 [shape = 's32[1]{0}', space=sflag, size = 0x4, scoped, tag = 'scoped memory for tpu_custom_call.1']
    #allocation9 [shape = 's32[1]{0}', space=sflag, size = 0x4, scoped, tag = 'scoped memory for tpu_custom_call.1']
    #allocation10 [shape = 'u8[8192]{0}', space=vmem, size = 0x2000, scoped, tag = 'input window, operand 1, single buffered']
    #allocation11 [shape = 's32[1]{0}', space=sflag, size = 0x4, scoped, tag = 'scoped memory for tpu_custom_call.1']
    #allocation12 [shape = 'u8[1024]{0}', space=smem, size = 0x400, scoped, tag = 'input window, operand 2, single buffered']
    #allocation13 [shape = 'u8[8192]{0}', space=vmem, size = 0x2000, scoped, tag = 'output window, operand 0, single buffered']
    %10 = vsyncpa [#allocation7], 0
    %11 = vsyncpa [#allocation11], 0
    %12 = vsyncpa [#allocation9], 0
    %13 = vsyncpa [#allocation8], 0
    // Predicated region
    $region2: #{tpu_custom_call.1} parent=1 // pred_check
      _
    $region3: #{tpu_custom_call.1} parent=1 // pred_check_branch
      %15 = sbr.rel (0) target = $region5
    $region4: #{tpu_custom_call.1} parent=1 // pred_region
      %s17 = ssub.s32 256, 256
      %18 = vsyncadd [#allocation7], %s17
      %s19 = sshll.u32 [#allocation6], 4
      %s20 = int_to_ptr.vmem [resolvable:$true] %s19
      %25 = dma.hbm_to_vmem [thread:$0]  %s0, 256, %s20, [#allocation7], 128, 128, 8
    $region5: #{tpu_custom_call.1} parent=1 // pred_fallthru
      _
    // Predicated region
    $region6: #{tpu_custom_call.1} parent=1 // pred_check
      _
    $region7: #{tpu_custom_call.1} parent=1 // pred_check_branch
      %27 = sbr.rel (0) target = $region9
    $region8: #{tpu_custom_call.1} parent=1 // pred_region
      %s29 = ssub.s32 256, 256
      %30 = vsyncadd [#allocation11], %s29
      %s32 = sshll.u32 [#allocation10], 4
      %s33 = int_to_ptr.vmem [resolvable:$true] %s32
      %35 = dma.hbm_to_vmem [thread:$0]  %s1, 256, %s33, [#allocation11]
    $region9: #{tpu_custom_call.1} parent=1 // pred_fallthru
      _
    // Predicated region
    $region10: #{tpu_custom_call.1} parent=1 // pred_check
      _
    $region11: #{tpu_custom_call.1} parent=1 // pred_check_branch
      %37 = sbr.rel (0) target = $region13
    $region12: #{tpu_custom_call.1} parent=1 // pred_region
      %s39 = ssub.s32 32, 32
      %40 = vsyncadd [#allocation9], %s39
      %s42 = sshll.u32 %s2, 4
      %s43 = int_to_ptr.vmem [resolvable:$true] %s42
      %45 = dma.vmem_to_smem %s43, 32, [#allocation12], [#allocation9]
    $region13: #{tpu_custom_call.1} parent=1 // pred_fallthru
      _
    // Predicated region
    $region14: #{tpu_custom_call.1} parent=1 // pred_check
      _
    $region15: #{tpu_custom_call.1} parent=1 // pred_check_branch
      %47 = sbr.rel (0) target = $region17
    $region16: #{tpu_custom_call.1} parent=1 // pred_region
      _
    $region17: #{tpu_custom_call.1} parent=1 // pred_fallthru
      _
    // Predicated region
    $region18: #{tpu_custom_call.1} parent=1 // pred_check
      _
    $region19: #{tpu_custom_call.1} parent=1 // pred_check_branch
      %49 = sbr.rel (0) target = $region21
    $region20: #{tpu_custom_call.1} parent=1 // pred_region
      %50 = dma.done [#allocation7], 256
    $region21: #{tpu_custom_call.1} parent=1 // pred_fallthru
      _
    // Predicated region
    $region22: #{tpu_custom_call.1} parent=1 // pred_check
      _
    $region23: #{tpu_custom_call.1} parent=1 // pred_check_branch
      %52 = sbr.rel (0) target = $region25
    $region24: #{tpu_custom_call.1} parent=1 // pred_region
      %53 = dma.done [#allocation11], 256
    $region25: #{tpu_custom_call.1} parent=1 // pred_fallthru
      _
    // Predicated region
    $region26: #{tpu_custom_call.1} parent=1 // pred_check
      _
    $region27: #{tpu_custom_call.1} parent=1 // pred_check_branch
      %55 = sbr.rel (0) target = $region29
    $region28: #{tpu_custom_call.1} parent=1 // pred_region
      %56 = dma.done [#allocation9], 32
    $region29: #{tpu_custom_call.1} parent=1 // pred_fallthru
      _
    %57 = sfence
    %vm58 = vcmask 410624
    %59 = vst.msk [vmem:[#allocation2] sm:$0x3] %vm58, 0.0
    %60 = vst.msk [vmem:[#allocation3] sm:$0x3] %vm58, 0.0
    %vm61 = vcmask 828824
    %62 = vst.msk [vmem:[#allocation2 + $0x4] sm:$0x3] %vm61, 0.0
    %63 = vst.msk [vmem:[#allocation3 + $0x4] sm:$0x3] %vm61, 0.0
    %vm64 = vcmask 25600
    %65 = vst.msk [vmem:[#allocation4] sm:$0x3] %vm64, 0.0
    %vm66 = vcmask 58400
    %67 = vst.msk [vmem:[#allocation4 + $0x4] sm:$0x3] %vm66, 0.0
    %v68 = vld [vmem:[#allocation6] sm:$0xff]
    %v70 = vcombine.high %v68, %v68
    %vm72 = vcmask 1043456
    %v73 = vsel %vm72, %v68, -inf
    %v74 = vrot.slane %v73, 4
    %v75 = vmax.f32 %v73, %v74
    %v76 = vrot.slane %v75, 2
    %v77 = vmax.f32 %v75, %v76
    %v78 = vrot.slane %v77, 1
    %v79 = vmax.f32 %v77, %v78
    %v80 = vsel %vm72, %v70, -inf
    %v81 = vrot.slane %v80, 4
    %v82 = vmax.f32 %v80, %v81
    %v83 = vrot.slane %v82, 2
    %v84 = vmax.f32 %v82, %v83
    %v85 = vrot.slane %v84, 1
    %v86 = vmax.f32 %v84, %v85
    %v87 = vsel %vm72, %v68, 0.0
    %v88 = vrot.slane %v87, 4
    %v89 = vadd.f32 %v87, %v88
    %v90 = vrot.slane %v89, 2
    %v91 = vadd.f32 %v89, %v90
    %v92 = vrot.slane %v91, 1
    %v93 = vadd.f32 %v91, %v92
    %v94 = vsel %vm72, %v70, 0.0
    %v95 = vrot.slane %v94, 4
    %v96 = vadd.f32 %v94, %v95
    %v97 = vrot.slane %v96, 2
    %v98 = vadd.f32 %v96, %v97
    %v99 = vrot.slane %v98, 1
    %v100 = vadd.f32 %v98, %v99
    %v103 = vcombine.low %v79, %v86
    %v105 = vunpack.c.l.s4 1966171168
    %v106 = vunpack.c.0.s8 %v105
    %v107 = vlaneseq
    %v108 = vshrl.u32 %v107, 7
    %v109 = vsub.s32 %v106, %v108
    %v110 = vrot.slane %v103, %v109
    %v112 = vunpack.c.l.s4 1966171168
    %v113 = vunpack.c.0.s8 %v112
    %v114 = vlaneseq
    %v115 = vshrl.u32 %v114, 7
    %v116 = vsub.s32 %v113, %v115
    %v117 = vrot.slane %v110, %v116
    %118 = vrot.lane.b32.xlu0 %v117, 51
    %v119 = vpop.permute.xlu0 %118
    %v120 = vrot.slane %v119, 7
    %vm121 = vcmask 416768
    %v122 = vsel %vm121, %v120, %v119
    %v124 = vlaneseq
    %vm125 = vcmp.ge.s32.totalorder %v124, 51
    %vm126 = vcmp.lt.s32.totalorder %v124, 307
    %vm127 = vmand %vm125, %vm126
    %128 = vst.msk [vmem:[#allocation2] ss:$2 sm:$0x7] %vm127, %v122
    %v129 = vmul.f32 %v93, 0.25
    %v130 = vmul.f32 %v100, 0.25
    %v133 = vcombine.low %v129, %v130
    %v135 = vunpack.c.l.s4 1966171168
    %v136 = vunpack.c.0.s8 %v135
    %v137 = vlaneseq
    %v138 = vshrl.u32 %v137, 7
    %v139 = vsub.s32 %v136, %v138
    %v140 = vrot.slane %v133, %v139
    %v142 = vunpack.c.l.s4 1966171168
    %v143 = vunpack.c.0.s8 %v142
    %v144 = vlaneseq
    %v145 = vshrl.u32 %v144, 7
    %v146 = vsub.s32 %v143, %v145
    %v147 = vrot.slane %v140, %v146
    %148 = vrot.lane.b32.xlu0 %v147, 51
    %v149 = vpop.permute.xlu0 %148
    %v150 = vrot.slane %v149, 7
    %v151 = vsel %vm121, %v150, %v149
    %153 = vst.msk [vmem:[#allocation3] ss:$2 sm:$0x7] %vm127, %v151
    %s154 = scalar_lea.vmem [#allocation6], 8
    %v155 = vld [vmem:[%s154] sm:$0xff]
    %v157 = vcombine.high %v155, %v155
    %v159 = vsel %vm72, %v155, -inf
    %v160 = vrot.slane %v159, 4
    %v161 = vmax.f32 %v159, %v160
    %v162 = vrot.slane %v161, 2
    %v163 = vmax.f32 %v161, %v162
    %v164 = vrot.slane %v163, 1
    %v165 = vmax.f32 %v163, %v164
    %v166 = vsel %vm72, %v157, -inf
    %v167 = vrot.slane %v166, 4
    %v168 = vmax.f32 %v166, %v167
    %v169 = vrot.slane %v168, 2
    %v170 = vmax.f32 %v168, %v169
    %v171 = vrot.slane %v170, 1
    %v172 = vmax.f32 %v170, %v171
    %v173 = vsel %vm72, %v155, 0.0
    %v174 = vrot.slane %v173, 4
    %v175 = vadd.f32 %v173, %v174
    %v176 = vrot.slane %v175, 2
    %v177 = vadd.f32 %v175, %v176
    %v178 = vrot.slane %v177, 1
    %v179 = vadd.f32 %v177, %v178
    %v180 = vsel %vm72, %v157, 0.0
    %v181 = vrot.slane %v180, 4
    %v182 = vadd.f32 %v180, %v181
    %v183 = vrot.slane %v182, 2
    %v184 = vadd.f32 %v182, %v183
    %v185 = vrot.slane %v184, 1
    %v186 = vadd.f32 %v184, %v185
    %v189 = vcombine.low %v165, %v172
    %v191 = vunpack.c.l.s4 1966171168
    %v192 = vunpack.c.0.s8 %v191
    %v193 = vlaneseq
    %v194 = vshrl.u32 %v193, 7
    %v195 = vsub.s32 %v192, %v194
    %v196 = vrot.slane %v189, %v195
    %v198 = vunpack.c.l.s4 1966171168
    %v199 = vunpack.c.0.s8 %v198
    %v200 = vlaneseq
    %v201 = vshrl.u32 %v200, 7
    %v202 = vsub.s32 %v199, %v201
    %v203 = vrot.slane %v196, %v202
    %204 = vrot.lane.b32.xlu0 %v203, 51
    %v205 = vpop.permute.xlu0 %204
    %v206 = vrot.slane %v205, 7
    %v207 = vsel %vm121, %v206, %v205
    %s209 = scalar_lea.vmem [#allocation2], 1
    %210 = vst.msk [vmem:[%s209] ss:$2 sm:$0x7] %vm127, %v207
    %v211 = vmul.f32 %v179, 0.25
    %v212 = vmul.f32 %v186, 0.25
    %v215 = vcombine.low %v211, %v212
    %v217 = vunpack.c.l.s4 1966171168
    %v218 = vunpack.c.0.s8 %v217
    %v219 = vlaneseq
    %v220 = vshrl.u32 %v219, 7
    %v221 = vsub.s32 %v218, %v220
    %v222 = vrot.slane %v215, %v221
    %v224 = vunpack.c.l.s4 1966171168
    %v225 = vunpack.c.0.s8 %v224
    %v226 = vlaneseq
    %v227 = vshrl.u32 %v226, 7
    %v228 = vsub.s32 %v225, %v227
    %v229 = vrot.slane %v222, %v228
    %230 = vrot.lane.b32.xlu0 %v229, 51
    %v231 = vpop.permute.xlu0 %230
    %v232 = vrot.slane %v231, 7
    %v233 = vsel %vm121, %v232, %v231
    %s235 = scalar_lea.vmem [#allocation3], 1
    %236 = vst.msk [vmem:[%s235] ss:$2 sm:$0x7] %vm127, %v233
    %v237 = vld [vmem:[#allocation2] sm:$0x3f]
    %v238 = vld [vmem:[#allocation3] sm:$0x3f]
    %s239 = sld [smem:[#allocation12]]
    %v240 = vstv %s239
    %v241 = vmul.f32 %v240, %v237
    %v242 = vadd.f32 %v241, 0.0
    %s243 = sld [smem:[#allocation12 + $0x80]]
    %v244 = vstv %s243
    %v245 = vmul.f32 %v244, %v238
    %v246 = vadd.f32 %v242, %v245
    %s247 = sld [smem:[#allocation12 + $0x7]]
    %v248 = vstv %s247
    %v249 = vmul.f32 %v248, %v237
    %251 = vrot.lane.b32.xlu0 %v249, 112
    %v252 = vpop.permute.xlu0 %251
    %v253 = vrot.slane %v252, 2
    %vm254 = vcmask 916480
    %v255 = vsel %vm254, %v252, %v253
    %v257 = vadd.f32 %v246, %v255
    %s258 = sld [smem:[#allocation12 + $0x87]]
    %v259 = vstv %s258
    %v260 = vmul.f32 %v259, %v238
    %262 = vrot.lane.b32.xlu0 %v260, 112
    %v263 = vpop.permute.xlu0 %262
    %v264 = vrot.slane %v263, 2
    %v265 = vsel %vm254, %v263, %v264
    %v267 = vadd.f32 %v257, %v265
    %s268 = sld [smem:[#allocation12 + $0xe]]
    %v269 = vstv %s268
    %v270 = vmul.f32 %v269, %v237
    %272 = vrot.lane.b32.xlu0 %v270, 96
    %v273 = vpop.permute.xlu0 %272
    %v274 = vrot.slane %v273, 2
    %vm275 = vcmask 785408
    %v276 = vsel %vm275, %v273, %v274
    %v278 = vadd.f32 %v267, %v276
    %s279 = sld [smem:[#allocation12 + $0x8e]]
    %v280 = vstv %s279
    %v281 = vmul.f32 %v280, %v238
    %283 = vrot.lane.b32.xlu0 %v281, 96
    %v284 = vpop.permute.xlu0 %283
    %v285 = vrot.slane %v284, 2
    %v286 = vsel %vm275, %v284, %v285
    %v288 = vadd.f32 %v278, %v286
    %s289 = sld [smem:[#allocation12 + $0x15]]
    %v290 = vstv %s289
    %v291 = vmul.f32 %v290, %v237
    %293 = vrot.lane.b32.xlu0 %v291, 80
    %v294 = vpop.permute.xlu0 %293
    %v295 = vrot.slane %v294, 2
    %vm296 = vcmask 654336
    %v297 = vsel %vm296, %v294, %v295
    %v299 = vadd.f32 %v288, %v297
    %s300 = sld [smem:[#allocation12 + $0x95]]
    %v301 = vstv %s300
    %v302 = vmul.f32 %v301, %v238
    %304 = vrot.lane.b32.xlu0 %v302, 80
    %v305 = vpop.permute.xlu0 %304
    %v306 = vrot.slane %v305, 2
    %v307 = vsel %vm296, %v305, %v306
    %v309 = vadd.f32 %v299, %v307
    %s310 = sld [smem:[#allocation12 + $0x1c]]
    %v311 = vstv %s310
    %v312 = vmul.f32 %v311, %v237
    %314 = vrot.lane.b32.xlu0 %v312, 64
    %v315 = vpop.permute.xlu0 %314
    %v316 = vrot.slane %v315, 2
    %vm317 = vcmask 523264
    %v318 = vsel %vm317, %v315, %v316
    %v320 = vadd.f32 %v309, %v318
    %s321 = sld [smem:[#allocation12 + $0x9c]]
    %v322 = vstv %s321
    %v323 = vmul.f32 %v322, %v238
    %325 = vrot.lane.b32.xlu0 %v323, 64
    %v326 = vpop.permute.xlu0 %325
    %v327 = vrot.slane %v326, 2
    %v328 = vsel %vm317, %v326, %v327
    %v330 = vadd.f32 %v320, %v328
    %s331 = sld [smem:[#allocation12 + $0x23]]
    %v332 = vstv %s331
    %v333 = vmul.f32 %v332, %v237
    %335 = vrot.lane.b32.xlu0 %v333, 48
    %v336 = vpop.permute.xlu0 %335
    %v337 = vrot.slane %v336, 2
    %vm338 = vcmask 392192
    %v339 = vsel %vm338, %v336, %v337
    %v341 = vadd.f32 %v330, %v339
    %s342 = sld [smem:[#allocation12 + $0xa3]]
    %v343 = vstv %s342
    %v344 = vmul.f32 %v343, %v238
    %346 = vrot.lane.b32.xlu0 %v344, 48
    %v347 = vpop.permute.xlu0 %346
    %v348 = vrot.slane %v347, 2
    %v349 = vsel %vm338, %v347, %v348
    %v351 = vadd.f32 %v341, %v349
    %s352 = sld [smem:[#allocation12 + $0x2a]]
    %v353 = vstv %s352
    %v354 = vmul.f32 %v353, %v237
    %356 = vrot.lane.b32.xlu0 %v354, 32
    %v357 = vpop.permute.xlu0 %356
    %v358 = vrot.slane %v357, 2
    %vm359 = vcmask 261120
    %v360 = vsel %vm359, %v357, %v358
    %v362 = vadd.f32 %v351, %v360
    %s363 = sld [smem:[#allocation12 + $0xaa]]
    %v364 = vstv %s363
    %v365 = vmul.f32 %v364, %v238
    %367 = vrot.lane.b32.xlu0 %v365, 32
    %v368 = vpop.permute.xlu0 %367
    %v369 = vrot.slane %v368, 2
    %v370 = vsel %vm359, %v368, %v369
    %v372 = vadd.f32 %v362, %v370
    %374 = vrot.lane.b32.xlu0 %v372, 1
    %v375 = vpop.permute.xlu0 %374
    %v376 = vrot.slane %v375, 6
    %vm377 = vcmask 7168
    %v378 = vsel %vm377, %v376, %v375
    %vm380 = vcmask 1041440
    %vm381 = vcmask 1043458
    %vm382 = vmor %vm381, %vm380
    %vm383 = vcmask 29700
    %vm384 = vmor %vm383, %vm382
    %385 = vst.msk [vmem:[#allocation4] sm:$0x3f] %vm384, %v378
    %v386 = vld [vmem:[#allocation4] sm:$0x3f]
    %v387 = vld [vmem:[#allocation10] ss:$8 sm:$0x3]
    %v389 = vlaneseq
    %v390 = vshrl.u32 %v389, 7
    %v391 = vsub.s32 0, %v390
    %v392 = vrot.slane %v387, %v391
    %v393 = vlaneseq
    %v394 = vshrl.u32 %v393, 7
    %v395 = vsub.s32 1, %v394
    %v396 = vrot.slane %v387, %v395
    %v397 = vcombine.low %v392, %v396
    %v399 = vunpack.c.l.s4 1983009808
    %v400 = vunpack.c.0.s8 %v399
    %v401 = vlaneseq
    %v402 = vshrl.u32 %v401, 7
    %v403 = vsub.s32 %v400, %v402
    %v404 = vrot.slane %v397, %v403
    %405 = vrot.lane.b32.xlu0 %v404, 1
    %v406 = vpop.permute.xlu0 %405
    %v407 = vrot.slane %v406, 6
    %v408 = vsel %vm377, %v407, %v406
    %v410 = vmul.f32 %v386, %v408
    %v411 = vadd.f32 %v410, 0.0
    %s412 = sld [smem:[#allocation12 + $0x1]]
    %v413 = vstv %s412
    %v414 = vmul.f32 %v413, %v237
    %v415 = vadd.f32 %v414, 0.0
    %s416 = sld [smem:[#allocation12 + $0x81]]
    %v417 = vstv %s416
    %v418 = vmul.f32 %v417, %v238
    %v419 = vadd.f32 %v415, %v418
    %s420 = sld [smem:[#allocation12 + $0x8]]
    %v421 = vstv %s420
    %v422 = vmul.f32 %v421, %v237
    %424 = vrot.lane.b32.xlu0 %v422, 112
    %v425 = vpop.permute.xlu0 %424
    %v426 = vrot.slane %v425, 2
    %v427 = vsel %vm254, %v425, %v426
    %v429 = vadd.f32 %v419, %v427
    %s430 = sld [smem:[#allocation12 + $0x88]]
    %v431 = vstv %s430
    %v432 = vmul.f32 %v431, %v238
    %434 = vrot.lane.b32.xlu0 %v432, 112
    %v435 = vpop.permute.xlu0 %434
    %v436 = vrot.slane %v435, 2
    %v437 = vsel %vm254, %v435, %v436
    %v439 = vadd.f32 %v429, %v437
    %s440 = sld [smem:[#allocation12 + $0xf]]
    %v441 = vstv %s440
    %v442 = vmul.f32 %v441, %v237
    %444 = vrot.lane.b32.xlu0 %v442, 96
    %v445 = vpop.permute.xlu0 %444
    %v446 = vrot.slane %v445, 2
    %v447 = vsel %vm275, %v445, %v446
    %v449 = vadd.f32 %v439, %v447
    %s450 = sld [smem:[#allocation12 + $0x8f]]
    %v451 = vstv %s450
    %v452 = vmul.f32 %v451, %v238
    %454 = vrot.lane.b32.xlu0 %v452, 96
    %v455 = vpop.permute.xlu0 %454
    %v456 = vrot.slane %v455, 2
    %v457 = vsel %vm275, %v455, %v456
    %v459 = vadd.f32 %v449, %v457
    %s460 = sld [smem:[#allocation12 + $0x16]]
    %v461 = vstv %s460
    %v462 = vmul.f32 %v461, %v237
    %464 = vrot.lane.b32.xlu0 %v462, 80
    %v465 = vpop.permute.xlu0 %464
    %v466 = vrot.slane %v465, 2
    %v467 = vsel %vm296, %v465, %v466
    %v469 = vadd.f32 %v459, %v467
    %s470 = sld [smem:[#allocation12 + $0x96]]
    %v471 = vstv %s470
    %v472 = vmul.f32 %v471, %v238
    %474 = vrot.lane.b32.xlu0 %v472, 80
    %v475 = vpop.permute.xlu0 %474
    %v476 = vrot.slane %v475, 2
    %v477 = vsel %vm296, %v475, %v476
    %v479 = vadd.f32 %v469, %v477
    %s480 = sld [smem:[#allocation12 + $0x1d]]
    %v481 = vstv %s480
    %v482 = vmul.f32 %v481, %v237
    %484 = vrot.lane.b32.xlu0 %v482, 64
    %v485 = vpop.permute.xlu0 %484
    %v486 = vrot.slane %v485, 2
    %v487 = vsel %vm317, %v485, %v486
    %v489 = vadd.f32 %v479, %v487
    %s490 = sld [smem:[#allocation12 + $0x9d]]
    %v491 = vstv %s490
    %v492 = vmul.f32 %v491, %v238
    %494 = vrot.lane.b32.xlu0 %v492, 64
    %v495 = vpop.permute.xlu0 %494
    %v496 = vrot.slane %v495, 2
    %v497 = vsel %vm317, %v495, %v496
    %v499 = vadd.f32 %v489, %v497
    %s500 = sld [smem:[#allocation12 + $0x24]]
    %v501 = vstv %s500
    %v502 = vmul.f32 %v501, %v237
    %504 = vrot.lane.b32.xlu0 %v502, 48
    %v505 = vpop.permute.xlu0 %504
    %v506 = vrot.slane %v505, 2
    %v507 = vsel %vm338, %v505, %v506
    %v509 = vadd.f32 %v499, %v507
    %s510 = sld [smem:[#allocation12 + $0xa4]]
    %v511 = vstv %s510
    %v512 = vmul.f32 %v511, %v238
    %514 = vrot.lane.b32.xlu0 %v512, 48
    %v515 = vpop.permute.xlu0 %514
    %v516 = vrot.slane %v515, 2
    %v517 = vsel %vm338, %v515, %v516
    %v519 = vadd.f32 %v509, %v517
    %s520 = sld [smem:[#allocation12 + $0x2b]]
    %v521 = vstv %s520
    %v522 = vmul.f32 %v521, %v237
    %524 = vrot.lane.b32.xlu0 %v522, 32
    %v525 = vpop.permute.xlu0 %524
    %v526 = vrot.slane %v525, 2
    %v527 = vsel %vm359, %v525, %v526
    %v529 = vadd.f32 %v519, %v527
    %s530 = sld [smem:[#allocation12 + $0xab]]
    %v531 = vstv %s530
    %v532 = vmul.f32 %v531, %v238
    %534 = vrot.lane.b32.xlu0 %v532, 32
    %v535 = vpop.permute.xlu0 %534
    %v536 = vrot.slane %v535, 2
    %v537 = vsel %vm359, %v535, %v536
    %v539 = vadd.f32 %v529, %v537
    %541 = vrot.lane.b32.xlu0 %v539, 1
    %v542 = vpop.permute.xlu0 %541
    %v543 = vrot.slane %v542, 6
    %v544 = vsel %vm377, %v543, %v542
    %546 = vst.msk [vmem:[#allocation4] sm:$0x3f] %vm384, %v544
    %v547 = vld [vmem:[#allocation4] sm:$0x3f]
    %s548 = scalar_lea.vmem [#allocation10], 1
    %v549 = vld [vmem:[%s548] ss:$8 sm:$0x3]
    %v551 = vlaneseq
    %v552 = vshrl.u32 %v551, 7
    %v553 = vsub.s32 0, %v552
    %v554 = vrot.slane %v549, %v553
    %v555 = vlaneseq
    %v556 = vshrl.u32 %v555, 7
    %v557 = vsub.s32 1, %v556
    %v558 = vrot.slane %v549, %v557
    %v559 = vcombine.low %v554, %v558
    %v561 = vunpack.c.l.s4 1983009808
    %v562 = vunpack.c.0.s8 %v561
    %v563 = vlaneseq
    %v564 = vshrl.u32 %v563, 7
    %v565 = vsub.s32 %v562, %v564
    %v566 = vrot.slane %v559, %v565
    %567 = vrot.lane.b32.xlu0 %v566, 2
    %v568 = vpop.permute.xlu0 %567
    %v569 = vrot.slane %v568, 6
    %vm570 = vcmask 15360
    %v571 = vsel %vm570, %v569, %v568
    %v573 = vmul.f32 %v547, %v571
    %575 = vrot.lane.b32.xlu0 %v573, 127
    %v576 = vpop.permute.xlu0 %575
    %v577 = vrot.slane %v576, 2
    %vm578 = vcmask 1039360
    %v579 = vsel %vm578, %v576, %v577
    %v581 = vadd.f32 %v411, %v579
    %s582 = sld [smem:[#allocation12 + $0x2]]
    %v583 = vstv %s582
    %v584 = vmul.f32 %v583, %v237
    %v585 = vadd.f32 %v584, 0.0
    %s586 = sld [smem:[#allocation12 + $0x82]]
    %v587 = vstv %s586
    %v588 = vmul.f32 %v587, %v238
    %v589 = vadd.f32 %v585, %v588
    %s590 = sld [smem:[#allocation12 + $0x9]]
    %v591 = vstv %s590
    %v592 = vmul.f32 %v591, %v237
    %594 = vrot.lane.b32.xlu0 %v592, 112
    %v595 = vpop.permute.xlu0 %594
    %v596 = vrot.slane %v595, 2
    %v597 = vsel %vm254, %v595, %v596
    %v599 = vadd.f32 %v589, %v597
    %s600 = sld [smem:[#allocation12 + $0x89]]
    %v601 = vstv %s600
    %v602 = vmul.f32 %v601, %v238
    %604 = vrot.lane.b32.xlu0 %v602, 112
    %v605 = vpop.permute.xlu0 %604
    %v606 = vrot.slane %v605, 2
    %v607 = vsel %vm254, %v605, %v606
    %v609 = vadd.f32 %v599, %v607
    %s610 = sld [smem:[#allocation12 + $0x10]]
    %v611 = vstv %s610
    %v612 = vmul.f32 %v611, %v237
    %614 = vrot.lane.b32.xlu0 %v612, 96
    %v615 = vpop.permute.xlu0 %614
    %v616 = vrot.slane %v615, 2
    %v617 = vsel %vm275, %v615, %v616
    %v619 = vadd.f32 %v609, %v617
    %s620 = sld [smem:[#allocation12 + $0x90]]
    %v621 = vstv %s620
    %v622 = vmul.f32 %v621, %v238
    %624 = vrot.lane.b32.xlu0 %v622, 96
    %v625 = vpop.permute.xlu0 %624
    %v626 = vrot.slane %v625, 2
    %v627 = vsel %vm275, %v625, %v626
    %v629 = vadd.f32 %v619, %v627
    %s630 = sld [smem:[#allocation12 + $0x17]]
    %v631 = vstv %s630
    %v632 = vmul.f32 %v631, %v237
    %634 = vrot.lane.b32.xlu0 %v632, 80
    %v635 = vpop.permute.xlu0 %634
    %v636 = vrot.slane %v635, 2
    %v637 = vsel %vm296, %v635, %v636
    %v639 = vadd.f32 %v629, %v637
    %s640 = sld [smem:[#allocation12 + $0x97]]
    %v641 = vstv %s640
    %v642 = vmul.f32 %v641, %v238
    %644 = vrot.lane.b32.xlu0 %v642, 80
    %v645 = vpop.permute.xlu0 %644
    %v646 = vrot.slane %v645, 2
    %v647 = vsel %vm296, %v645, %v646
    %v649 = vadd.f32 %v639, %v647
    %s650 = sld [smem:[#allocation12 + $0x1e]]
    %v651 = vstv %s650
    %v652 = vmul.f32 %v651, %v237
    %654 = vrot.lane.b32.xlu0 %v652, 64
    %v655 = vpop.permute.xlu0 %654
    %v656 = vrot.slane %v655, 2
    %v657 = vsel %vm317, %v655, %v656
    %v659 = vadd.f32 %v649, %v657
    %s660 = sld [smem:[#allocation12 + $0x9e]]
    %v661 = vstv %s660
    %v662 = vmul.f32 %v661, %v238
    %664 = vrot.lane.b32.xlu0 %v662, 64
    %v665 = vpop.permute.xlu0 %664
    %v666 = vrot.slane %v665, 2
    %v667 = vsel %vm317, %v665, %v666
    %v669 = vadd.f32 %v659, %v667
    %s670 = sld [smem:[#allocation12 + $0x25]]
    %v671 = vstv %s670
    %v672 = vmul.f32 %v671, %v237
    %674 = vrot.lane.b32.xlu0 %v672, 48
    %v675 = vpop.permute.xlu0 %674
    %v676 = vrot.slane %v675, 2
    %v677 = vsel %vm338, %v675, %v676
    %v679 = vadd.f32 %v669, %v677
    %s680 = sld [smem:[#allocation12 + $0xa5]]
    %v681 = vstv %s680
    %v682 = vmul.f32 %v681, %v238
    %684 = vrot.lane.b32.xlu0 %v682, 48
    %v685 = vpop.permute.xlu0 %684
    %v686 = vrot.slane %v685, 2
    %v687 = vsel %vm338, %v685, %v686
    %v689 = vadd.f32 %v679, %v687
    %s690 = sld [smem:[#allocation12 + $0x2c]]
    %v691 = vstv %s690
    %v692 = vmul.f32 %v691, %v237
    %694 = vrot.lane.b32.xlu0 %v692, 32
    %v695 = vpop.permute.xlu0 %694
    %v696 = vrot.slane %v695, 2
    %v697 = vsel %vm359, %v695, %v696
    %v699 = vadd.f32 %v689, %v697
    %s700 = sld [smem:[#allocation12 + $0xac]]
    %v701 = vstv %s700
    %v702 = vmul.f32 %v701, %v238
    %704 = vrot.lane.b32.xlu0 %v702, 32
    %v705 = vpop.permute.xlu0 %704
    %v706 = vrot.slane %v705, 2
    %v707 = vsel %vm359, %v705, %v706
    %v709 = vadd.f32 %v699, %v707
    %711 = vrot.lane.b32.xlu0 %v709, 1
    %v712 = vpop.permute.xlu0 %711
    %v713 = vrot.slane %v712, 6
    %v714 = vsel %vm377, %v713, %v712
    %716 = vst.msk [vmem:[#allocation4] sm:$0x3f] %vm384, %v714
    %v717 = vld [vmem:[#allocation4] sm:$0x3f]
    %s718 = scalar_lea.vmem [#allocation10], 2
    %v719 = vld [vmem:[%s718] ss:$8 sm:$0x3]
    %v721 = vlaneseq
    %v722 = vshrl.u32 %v721, 7
    %v723 = vsub.s32 0, %v722
    %v724 = vrot.slane %v719, %v723
    %v725 = vlaneseq
    %v726 = vshrl.u32 %v725, 7
    %v727 = vsub.s32 1, %v726
    %v728 = vrot.slane %v719, %v727
    %v729 = vcombine.low %v724, %v728
    %v731 = vunpack.c.l.s4 1983009808
    %v732 = vunpack.c.0.s8 %v731
    %v733 = vlaneseq
    %v734 = vshrl.u32 %v733, 7
    %v735 = vsub.s32 %v732, %v734
    %v736 = vrot.slane %v729, %v735
    %737 = vrot.lane.b32.xlu0 %v736, 3
    %v738 = vpop.permute.xlu0 %737
    %v739 = vrot.slane %v738, 6
    %vm740 = vcmask 23552
    %v741 = vsel %vm740, %v739, %v738
    %v743 = vmul.f32 %v717, %v741
    %745 = vrot.lane.b32.xlu0 %v743, 126
    %v746 = vpop.permute.xlu0 %745
    %v747 = vrot.slane %v746, 2
    %vm748 = vcmask 1031168
    %v749 = vsel %vm748, %v746, %v747
    %v751 = vadd.f32 %v581, %v749
    %s752 = sld [smem:[#allocation12 + $0x3]]
    %v753 = vstv %s752
    %v754 = vmul.f32 %v753, %v237
    %v755 = vadd.f32 %v754, 0.0
    %s756 = sld [smem:[#allocation12 + $0x83]]
    %v757 = vstv %s756
    %v758 = vmul.f32 %v757, %v238
    %v759 = vadd.f32 %v755, %v758
    %s760 = sld [smem:[#allocation12 + $0xa]]
    %v761 = vstv %s760
    %v762 = vmul.f32 %v761, %v237
    %764 = vrot.lane.b32.xlu0 %v762, 112
    %v765 = vpop.permute.xlu0 %764
    %v766 = vrot.slane %v765, 2
    %v767 = vsel %vm254, %v765, %v766
    %v769 = vadd.f32 %v759, %v767
    %s770 = sld [smem:[#allocation12 + $0x8a]]
    %v771 = vstv %s770
    %v772 = vmul.f32 %v771, %v238
    %774 = vrot.lane.b32.xlu0 %v772, 112
    %v775 = vpop.permute.xlu0 %774
    %v776 = vrot.slane %v775, 2
    %v777 = vsel %vm254, %v775, %v776
    %v779 = vadd.f32 %v769, %v777
    %s780 = sld [smem:[#allocation12 + $0x11]]
    %v781 = vstv %s780
    %v782 = vmul.f32 %v781, %v237
    %784 = vrot.lane.b32.xlu0 %v782, 96
    %v785 = vpop.permute.xlu0 %784
    %v786 = vrot.slane %v785, 2
    %v787 = vsel %vm275, %v785, %v786
    %v789 = vadd.f32 %v779, %v787
    %s790 = sld [smem:[#allocation12 + $0x91]]
    %v791 = vstv %s790
    %v792 = vmul.f32 %v791, %v238
    %794 = vrot.lane.b32.xlu0 %v792, 96
    %v795 = vpop.permute.xlu0 %794
    %v796 = vrot.slane %v795, 2
    %v797 = vsel %vm275, %v795, %v796
    %v799 = vadd.f32 %v789, %v797
    %s800 = sld [smem:[#allocation12 + $0x18]]
    %v801 = vstv %s800
    %v802 = vmul.f32 %v801, %v237
    %804 = vrot.lane.b32.xlu0 %v802, 80
    %v805 = vpop.permute.xlu0 %804
    %v806 = vrot.slane %v805, 2
    %v807 = vsel %vm296, %v805, %v806
    %v809 = vadd.f32 %v799, %v807
    %s810 = sld [smem:[#allocation12 + $0x98]]
    %v811 = vstv %s810
    %v812 = vmul.f32 %v811, %v238
    %814 = vrot.lane.b32.xlu0 %v812, 80
    %v815 = vpop.permute.xlu0 %814
    %v816 = vrot.slane %v815, 2
    %v817 = vsel %vm296, %v815, %v816
    %v819 = vadd.f32 %v809, %v817
    %s820 = sld [smem:[#allocation12 + $0x1f]]
    %v821 = vstv %s820
    %v822 = vmul.f32 %v821, %v237
    %824 = vrot.lane.b32.xlu0 %v822, 64
    %v825 = vpop.permute.xlu0 %824
    %v826 = vrot.slane %v825, 2
    %v827 = vsel %vm317, %v825, %v826
    %v829 = vadd.f32 %v819, %v827
    %s830 = sld [smem:[#allocation12 + $0x9f]]
    %v831 = vstv %s830
    %v832 = vmul.f32 %v831, %v238
    %834 = vrot.lane.b32.xlu0 %v832, 64
    %v835 = vpop.permute.xlu0 %834
    %v836 = vrot.slane %v835, 2
    %v837 = vsel %vm317, %v835, %v836
    %v839 = vadd.f32 %v829, %v837
    %s840 = sld [smem:[#allocation12 + $0x26]]
    %v841 = vstv %s840
    %v842 = vmul.f32 %v841, %v237
    %844 = vrot.lane.b32.xlu0 %v842, 48
    %v845 = vpop.permute.xlu0 %844
    %v846 = vrot.slane %v845, 2
    %v847 = vsel %vm338, %v845, %v846
    %v849 = vadd.f32 %v839, %v847
    %s850 = sld [smem:[#allocation12 + $0xa6]]
    %v851 = vstv %s850
    %v852 = vmul.f32 %v851, %v238
    %854 = vrot.lane.b32.xlu0 %v852, 48
    %v855 = vpop.permute.xlu0 %854
    %v856 = vrot.slane %v855, 2
    %v857 = vsel %vm338, %v855, %v856
    %v859 = vadd.f32 %v849, %v857
    %s860 = sld [smem:[#allocation12 + $0x2d]]
    %v861 = vstv %s860
    %v862 = vmul.f32 %v861, %v237
    %864 = vrot.lane.b32.xlu0 %v862, 32
    %v865 = vpop.permute.xlu0 %864
    %v866 = vrot.slane %v865, 2
    %v867 = vsel %vm359, %v865, %v866
    %v869 = vadd.f32 %v859, %v867
    %s870 = sld [smem:[#allocation12 + $0xad]]
    %v871 = vstv %s870
    %v872 = vmul.f32 %v871, %v238
    %874 = vrot.lane.b32.xlu0 %v872, 32
    %v875 = vpop.permute.xlu0 %874
    %v876 = vrot.slane %v875, 2
    %v877 = vsel %vm359, %v875, %v876
    %v879 = vadd.f32 %v869, %v877
    %881 = vrot.lane.b32.xlu0 %v879, 126
    %v882 = vpop.permute.xlu0 %881
    %v883 = vrot.slane %v882, 2
    %v884 = vsel %vm748, %v882, %v883
    %v886 = vadd.f32 %v751, %v884
    %s887 = sld [smem:[#allocation12 + $0x4]]
    %v888 = vstv %s887
    %v889 = vmul.f32 %v888, %v237
    %v890 = vadd.f32 %v889, 0.0
    %s891 = sld [smem:[#allocation12 + $0x84]]
    %v892 = vstv %s891
    %v893 = vmul.f32 %v892, %v238
    %v894 = vadd.f32 %v890, %v893
    %s895 = sld [smem:[#allocation12 + $0xb]]
    %v896 = vstv %s895
    %v897 = vmul.f32 %v896, %v237
    %899 = vrot.lane.b32.xlu0 %v897, 112
    %v900 = vpop.permute.xlu0 %899
    %v901 = vrot.slane %v900, 2
    %v902 = vsel %vm254, %v900, %v901
    %v904 = vadd.f32 %v894, %v902
    %s905 = sld [smem:[#allocation12 + $0x8b]]
    %v906 = vstv %s905
    %v907 = vmul.f32 %v906, %v238
    %909 = vrot.lane.b32.xlu0 %v907, 112
    %v910 = vpop.permute.xlu0 %909
    %v911 = vrot.slane %v910, 2
    %v912 = vsel %vm254, %v910, %v911
    %v914 = vadd.f32 %v904, %v912
    %s915 = sld [smem:[#allocation12 + $0x12]]
    %v916 = vstv %s915
    %v917 = vmul.f32 %v916, %v237
    %919 = vrot.lane.b32.xlu0 %v917, 96
    %v920 = vpop.permute.xlu0 %919
    %v921 = vrot.slane %v920, 2
    %v922 = vsel %vm275, %v920, %v921
    %v924 = vadd.f32 %v914, %v922
    %s925 = sld [smem:[#allocation12 + $0x92]]
    %v926 = vstv %s925
    %v927 = vmul.f32 %v926, %v238
    %929 = vrot.lane.b32.xlu0 %v927, 96
    %v930 = vpop.permute.xlu0 %929
    %v931 = vrot.slane %v930, 2
    %v932 = vsel %vm275, %v930, %v931
    %v934 = vadd.f32 %v924, %v932
    %s935 = sld [smem:[#allocation12 + $0x19]]
    %v936 = vstv %s935
    %v937 = vmul.f32 %v936, %v237
    %939 = vrot.lane.b32.xlu0 %v937, 80
    %v940 = vpop.permute.xlu0 %939
    %v941 = vrot.slane %v940, 2
    %v942 = vsel %vm296, %v940, %v941
    %v944 = vadd.f32 %v934, %v942
    %s945 = sld [smem:[#allocation12 + $0x99]]
    %v946 = vstv %s945
    %v947 = vmul.f32 %v946, %v238
    %949 = vrot.lane.b32.xlu0 %v947, 80
    %v950 = vpop.permute.xlu0 %949
    %v951 = vrot.slane %v950, 2
    %v952 = vsel %vm296, %v950, %v951
    %v954 = vadd.f32 %v944, %v952
    %s955 = sld [smem:[#allocation12 + $0x20]]
    %v956 = vstv %s955
    %v957 = vmul.f32 %v956, %v237
    %959 = vrot.lane.b32.xlu0 %v957, 64
    %v960 = vpop.permute.xlu0 %959
    %v961 = vrot.slane %v960, 2
    %v962 = vsel %vm317, %v960, %v961
    %v964 = vadd.f32 %v954, %v962
    %s965 = sld [smem:[#allocation12 + $0xa0]]
    %v966 = vstv %s965
    %v967 = vmul.f32 %v966, %v238
    %969 = vrot.lane.b32.xlu0 %v967, 64
    %v970 = vpop.permute.xlu0 %969
    %v971 = vrot.slane %v970, 2
    %v972 = vsel %vm317, %v970, %v971
    %v974 = vadd.f32 %v964, %v972
    %s975 = sld [smem:[#allocation12 + $0x27]]
    %v976 = vstv %s975
    %v977 = vmul.f32 %v976, %v237
    %979 = vrot.lane.b32.xlu0 %v977, 48
    %v980 = vpop.permute.xlu0 %979
    %v981 = vrot.slane %v980, 2
    %v982 = vsel %vm338, %v980, %v981
    %v984 = vadd.f32 %v974, %v982
    %s985 = sld [smem:[#allocation12 + $0xa7]]
    %v986 = vstv %s985
    %v987 = vmul.f32 %v986, %v238
    %989 = vrot.lane.b32.xlu0 %v987, 48
    %v990 = vpop.permute.xlu0 %989
    %v991 = vrot.slane %v990, 2
    %v992 = vsel %vm338, %v990, %v991
    %v994 = vadd.f32 %v984, %v992
    %s995 = sld [smem:[#allocation12 + $0x2e]]
    %v996 = vstv %s995
    %v997 = vmul.f32 %v996, %v237
    %999 = vrot.lane.b32.xlu0 %v997, 32
    %v1000 = vpop.permute.xlu0 %999
    %v1001 = vrot.slane %v1000, 2
    %v1002 = vsel %vm359, %v1000, %v1001
    %v1004 = vadd.f32 %v994, %v1002
    %s1005 = sld [smem:[#allocation12 + $0xae]]
    %v1006 = vstv %s1005
    %v1007 = vmul.f32 %v1006, %v238
    %1009 = vrot.lane.b32.xlu0 %v1007, 32
    %v1010 = vpop.permute.xlu0 %1009
    %v1011 = vrot.slane %v1010, 2
    %v1012 = vsel %vm359, %v1010, %v1011
    %v1014 = vadd.f32 %v1004, %v1012
    %1016 = vrot.lane.b32.xlu0 %v1014, 1
    %v1017 = vpop.permute.xlu0 %1016
    %v1018 = vrot.slane %v1017, 6
    %v1019 = vsel %vm377, %v1018, %v1017
    %1021 = vst.msk [vmem:[#allocation4] sm:$0x3f] %vm384, %v1019
    %v1022 = vld [vmem:[#allocation4] sm:$0x3f]
    %s1023 = scalar_lea.vmem [#allocation10], 4
    %v1024 = vld [vmem:[%s1023] ss:$8 sm:$0x3]
    %v1026 = vlaneseq
    %v1027 = vshrl.u32 %v1026, 7
    %v1028 = vsub.s32 0, %v1027
    %v1029 = vrot.slane %v1024, %v1028
    %v1030 = vlaneseq
    %v1031 = vshrl.u32 %v1030, 7
    %v1032 = vsub.s32 1, %v1031
    %v1033 = vrot.slane %v1024, %v1032
    %v1034 = vcombine.low %v1029, %v1033
    %v1036 = vunpack.c.l.s4 1983009808
    %v1037 = vunpack.c.0.s8 %v1036
    %v1038 = vlaneseq
    %v1039 = vshrl.u32 %v1038, 7
    %v1040 = vsub.s32 %v1037, %v1039
    %v1041 = vrot.slane %v1034, %v1040
    %1042 = vrot.lane.b32.xlu0 %v1041, 5
    %v1043 = vpop.permute.xlu0 %1042
    %v1044 = vrot.slane %v1043, 6
    %vm1045 = vcmask 39936
    %v1046 = vsel %vm1045, %v1044, %v1043
    %v1048 = vmul.f32 %v1022, %v1046
    %1050 = vrot.lane.b32.xlu0 %v1048, 124
    %v1051 = vpop.permute.xlu0 %1050
    %v1052 = vrot.slane %v1051, 2
    %vm1053 = vcmask 1014784
    %v1054 = vsel %vm1053, %v1051, %v1052
    %v1056 = vadd.f32 %v886, %v1054
    %s1057 = sld [smem:[#allocation12 + $0x5]]
    %v1058 = vstv %s1057
    %v1059 = vmul.f32 %v1058, %v237
    %v1060 = vadd.f32 %v1059, 0.0
    %s1061 = sld [smem:[#allocation12 + $0x85]]
    %v1062 = vstv %s1061
    %v1063 = vmul.f32 %v1062, %v238
    %v1064 = vadd.f32 %v1060, %v1063
    %s1065 = sld [smem:[#allocation12 + $0xc]]
    %v1066 = vstv %s1065
    %v1067 = vmul.f32 %v1066, %v237
    %1069 = vrot.lane.b32.xlu0 %v1067, 112
    %v1070 = vpop.permute.xlu0 %1069
    %v1071 = vrot.slane %v1070, 2
    %v1072 = vsel %vm254, %v1070, %v1071
    %v1074 = vadd.f32 %v1064, %v1072
    %s1075 = sld [smem:[#allocation12 + $0x8c]]
    %v1076 = vstv %s1075
    %v1077 = vmul.f32 %v1076, %v238
    %1079 = vrot.lane.b32.xlu0 %v1077, 112
    %v1080 = vpop.permute.xlu0 %1079
    %v1081 = vrot.slane %v1080, 2
    %v1082 = vsel %vm254, %v1080, %v1081
    %v1084 = vadd.f32 %v1074, %v1082
    %s1085 = sld [smem:[#allocation12 + $0x13]]
    %v1086 = vstv %s1085
    %v1087 = vmul.f32 %v1086, %v237
    %1089 = vrot.lane.b32.xlu0 %v1087, 96
    %v1090 = vpop.permute.xlu0 %1089
    %v1091 = vrot.slane %v1090, 2
    %v1092 = vsel %vm275, %v1090, %v1091
    %v1094 = vadd.f32 %v1084, %v1092
    %s1095 = sld [smem:[#allocation12 + $0x93]]
    %v1096 = vstv %s1095
    %v1097 = vmul.f32 %v1096, %v238
    %1099 = vrot.lane.b32.xlu0 %v1097, 96
    %v1100 = vpop.permute.xlu0 %1099
    %v1101 = vrot.slane %v1100, 2
    %v1102 = vsel %vm275, %v1100, %v1101
    %v1104 = vadd.f32 %v1094, %v1102
    %s1105 = sld [smem:[#allocation12 + $0x1a]]
    %v1106 = vstv %s1105
    %v1107 = vmul.f32 %v1106, %v237
    %1109 = vrot.lane.b32.xlu0 %v1107, 80
    %v1110 = vpop.permute.xlu0 %1109
    %v1111 = vrot.slane %v1110, 2
    %v1112 = vsel %vm296, %v1110, %v1111
    %v1114 = vadd.f32 %v1104, %v1112
    %s1115 = sld [smem:[#allocation12 + $0x9a]]
    %v1116 = vstv %s1115
    %v1117 = vmul.f32 %v1116, %v238
    %1119 = vrot.lane.b32.xlu0 %v1117, 80
    %v1120 = vpop.permute.xlu0 %1119
    %v1121 = vrot.slane %v1120, 2
    %v1122 = vsel %vm296, %v1120, %v1121
    %v1124 = vadd.f32 %v1114, %v1122
    %s1125 = sld [smem:[#allocation12 + $0x21]]
    %v1126 = vstv %s1125
    %v1127 = vmul.f32 %v1126, %v237
    %1129 = vrot.lane.b32.xlu0 %v1127, 64
    %v1130 = vpop.permute.xlu0 %1129
    %v1131 = vrot.slane %v1130, 2
    %v1132 = vsel %vm317, %v1130, %v1131
    %v1134 = vadd.f32 %v1124, %v1132
    %s1135 = sld [smem:[#allocation12 + $0xa1]]
    %v1136 = vstv %s1135
    %v1137 = vmul.f32 %v1136, %v238
    %1139 = vrot.lane.b32.xlu0 %v1137, 64
    %v1140 = vpop.permute.xlu0 %1139
    %v1141 = vrot.slane %v1140, 2
    %v1142 = vsel %vm317, %v1140, %v1141
    %v1144 = vadd.f32 %v1134, %v1142
    %s1145 = sld [smem:[#allocation12 + $0x28]]
    %v1146 = vstv %s1145
    %v1147 = vmul.f32 %v1146, %v237
    %1149 = vrot.lane.b32.xlu0 %v1147, 48
    %v1150 = vpop.permute.xlu0 %1149
    %v1151 = vrot.slane %v1150, 2
    %v1152 = vsel %vm338, %v1150, %v1151
    %v1154 = vadd.f32 %v1144, %v1152
    %s1155 = sld [smem:[#allocation12 + $0xa8]]
    %v1156 = vstv %s1155
    %v1157 = vmul.f32 %v1156, %v238
    %1159 = vrot.lane.b32.xlu0 %v1157, 48
    %v1160 = vpop.permute.xlu0 %1159
    %v1161 = vrot.slane %v1160, 2
    %v1162 = vsel %vm338, %v1160, %v1161
    %v1164 = vadd.f32 %v1154, %v1162
    %s1165 = sld [smem:[#allocation12 + $0x2f]]
    %v1166 = vstv %s1165
    %v1167 = vmul.f32 %v1166, %v237
    %1169 = vrot.lane.b32.xlu0 %v1167, 32
    %v1170 = vpop.permute.xlu0 %1169
    %v1171 = vrot.slane %v1170, 2
    %v1172 = vsel %vm359, %v1170, %v1171
    %v1174 = vadd.f32 %v1164, %v1172
    %s1175 = sld [smem:[#allocation12 + $0xaf]]
    %v1176 = vstv %s1175
    %v1177 = vmul.f32 %v1176, %v238
    %1179 = vrot.lane.b32.xlu0 %v1177, 32
    %v1180 = vpop.permute.xlu0 %1179
    %v1181 = vrot.slane %v1180, 2
    %v1182 = vsel %vm359, %v1180, %v1181
    %v1184 = vadd.f32 %v1174, %v1182
    %1186 = vrot.lane.b32.xlu0 %v1184, 1
    %v1187 = vpop.permute.xlu0 %1186
    %v1188 = vrot.slane %v1187, 6
    %v1189 = vsel %vm377, %v1188, %v1187
    %1191 = vst.msk [vmem:[#allocation4] sm:$0x3f] %vm384, %v1189
    %v1192 = vld [vmem:[#allocation4] sm:$0x3f]
    %s1193 = scalar_lea.vmem [#allocation10], 5
    %v1194 = vld [vmem:[%s1193] ss:$8 sm:$0x3]
    %v1196 = vlaneseq
    %v1197 = vshrl.u32 %v1196, 7
    %v1198 = vsub.s32 0, %v1197
    %v1199 = vrot.slane %v1194, %v1198
    %v1200 = vlaneseq
    %v1201 = vshrl.u32 %v1200, 7
    %v1202 = vsub.s32 1, %v1201
    %v1203 = vrot.slane %v1194, %v1202
    %v1204 = vcombine.low %v1199, %v1203
    %v1206 = vunpack.c.l.s4 1983009808
    %v1207 = vunpack.c.0.s8 %v1206
    %v1208 = vlaneseq
    %v1209 = vshrl.u32 %v1208, 7
    %v1210 = vsub.s32 %v1207, %v1209
    %v1211 = vrot.slane %v1204, %v1210
    %1212 = vrot.lane.b32.xlu0 %v1211, 6
    %v1213 = vpop.permute.xlu0 %1212
    %v1214 = vrot.slane %v1213, 6
    %vm1215 = vcmask 48128
    %v1216 = vsel %vm1215, %v1214, %v1213
    %v1218 = vmul.f32 %v1192, %v1216
    %1220 = vrot.lane.b32.xlu0 %v1218, 123
    %v1221 = vpop.permute.xlu0 %1220
    %v1222 = vrot.slane %v1221, 2
    %vm1223 = vcmask 1006592
    %v1224 = vsel %vm1223, %v1221, %v1222
    %v1226 = vadd.f32 %v1056, %v1224
    %s1227 = sld [smem:[#allocation12 + $0x6]]
    %v1228 = vstv %s1227
    %v1229 = vmul.f32 %v1228, %v237
    %v1230 = vadd.f32 %v1229, 0.0
    %s1231 = sld [smem:[#allocation12 + $0x86]]
    %v1232 = vstv %s1231
    %v1233 = vmul.f32 %v1232, %v238
    %v1234 = vadd.f32 %v1230, %v1233
    %s1235 = sld [smem:[#allocation12 + $0xd]]
    %v1236 = vstv %s1235
    %v1237 = vmul.f32 %v1236, %v237
    %1239 = vrot.lane.b32.xlu0 %v1237, 112
    %v1240 = vpop.permute.xlu0 %1239
    %v1241 = vrot.slane %v1240, 2
    %v1242 = vsel %vm254, %v1240, %v1241
    %v1244 = vadd.f32 %v1234, %v1242
    %s1245 = sld [smem:[#allocation12 + $0x8d]]
    %v1246 = vstv %s1245
    %v1247 = vmul.f32 %v1246, %v238
    %1249 = vrot.lane.b32.xlu0 %v1247, 112
    %v1250 = vpop.permute.xlu0 %1249
    %v1251 = vrot.slane %v1250, 2
    %v1252 = vsel %vm254, %v1250, %v1251
    %v1254 = vadd.f32 %v1244, %v1252
    %s1255 = sld [smem:[#allocation12 + $0x14]]
    %v1256 = vstv %s1255
    %v1257 = vmul.f32 %v1256, %v237
    %1259 = vrot.lane.b32.xlu0 %v1257, 96
    %v1260 = vpop.permute.xlu0 %1259
    %v1261 = vrot.slane %v1260, 2
    %v1262 = vsel %vm275, %v1260, %v1261
    %v1264 = vadd.f32 %v1254, %v1262
    %s1265 = sld [smem:[#allocation12 + $0x94]]
    %v1266 = vstv %s1265
    %v1267 = vmul.f32 %v1266, %v238
    %1269 = vrot.lane.b32.xlu0 %v1267, 96
    %v1270 = vpop.permute.xlu0 %1269
    %v1271 = vrot.slane %v1270, 2
    %v1272 = vsel %vm275, %v1270, %v1271
    %v1274 = vadd.f32 %v1264, %v1272
    %s1275 = sld [smem:[#allocation12 + $0x1b]]
    %v1276 = vstv %s1275
    %v1277 = vmul.f32 %v1276, %v237
    %1279 = vrot.lane.b32.xlu0 %v1277, 80
    %v1280 = vpop.permute.xlu0 %1279
    %v1281 = vrot.slane %v1280, 2
    %v1282 = vsel %vm296, %v1280, %v1281
    %v1284 = vadd.f32 %v1274, %v1282
    %s1285 = sld [smem:[#allocation12 + $0x9b]]
    %v1286 = vstv %s1285
    %v1287 = vmul.f32 %v1286, %v238
    %1289 = vrot.lane.b32.xlu0 %v1287, 80
    %v1290 = vpop.permute.xlu0 %1289
    %v1291 = vrot.slane %v1290, 2
    %v1292 = vsel %vm296, %v1290, %v1291
    %v1294 = vadd.f32 %v1284, %v1292
    %s1295 = sld [smem:[#allocation12 + $0x22]]
    %v1296 = vstv %s1295
    %v1297 = vmul.f32 %v1296, %v237
    %1299 = vrot.lane.b32.xlu0 %v1297, 64
    %v1300 = vpop.permute.xlu0 %1299
    %v1301 = vrot.slane %v1300, 2
    %v1302 = vsel %vm317, %v1300, %v1301
    %v1304 = vadd.f32 %v1294, %v1302
    %s1305 = sld [smem:[#allocation12 + $0xa2]]
    %v1306 = vstv %s1305
    %v1307 = vmul.f32 %v1306, %v238
    %1309 = vrot.lane.b32.xlu0 %v1307, 64
    %v1310 = vpop.permute.xlu0 %1309
    %v1311 = vrot.slane %v1310, 2
    %v1312 = vsel %vm317, %v1310, %v1311
    %v1314 = vadd.f32 %v1304, %v1312
    %s1315 = sld [smem:[#allocation12 + $0x29]]
    %v1316 = vstv %s1315
    %v1317 = vmul.f32 %v1316, %v237
    %1319 = vrot.lane.b32.xlu0 %v1317, 48
    %v1320 = vpop.permute.xlu0 %1319
    %v1321 = vrot.slane %v1320, 2
    %v1322 = vsel %vm338, %v1320, %v1321
    %v1324 = vadd.f32 %v1314, %v1322
    %s1325 = sld [smem:[#allocation12 + $0xa9]]
    %v1326 = vstv %s1325
    %v1327 = vmul.f32 %v1326, %v238
    %1329 = vrot.lane.b32.xlu0 %v1327, 48
    %v1330 = vpop.permute.xlu0 %1329
    %v1331 = vrot.slane %v1330, 2
    %v1332 = vsel %vm338, %v1330, %v1331
    %v1334 = vadd.f32 %v1324, %v1332
    %s1335 = sld [smem:[#allocation12 + $0x30]]
    %v1336 = vstv %s1335
    %v1337 = vmul.f32 %v1336, %v237
    %1339 = vrot.lane.b32.xlu0 %v1337, 32
    %v1340 = vpop.permute.xlu0 %1339
    %v1341 = vrot.slane %v1340, 2
    %v1342 = vsel %vm359, %v1340, %v1341
    %v1344 = vadd.f32 %v1334, %v1342
    %s1345 = sld [smem:[#allocation12 + $0xb0]]
    %v1346 = vstv %s1345
    %v1347 = vmul.f32 %v1346, %v238
    %1349 = vrot.lane.b32.xlu0 %v1347, 32
    %v1350 = vpop.permute.xlu0 %1349
    %v1351 = vrot.slane %v1350, 2
    %v1352 = vsel %vm359, %v1350, %v1351
    %v1354 = vadd.f32 %v1344, %v1352
    %1356 = vrot.lane.b32.xlu0 %v1354, 1
    %v1357 = vpop.permute.xlu0 %1356
    %v1358 = vrot.slane %v1357, 6
    %v1359 = vsel %vm377, %v1358, %v1357
    %1361 = vst.msk [vmem:[#allocation4] sm:$0x3f] %vm384, %v1359
    %v1362 = vld [vmem:[#allocation4] sm:$0x3f]
    %s1363 = scalar_lea.vmem [#allocation10], 6
    %v1364 = vld [vmem:[%s1363] ss:$8 sm:$0x3]
    %v1366 = vlaneseq
    %v1367 = vshrl.u32 %v1366, 7
    %v1368 = vsub.s32 0, %v1367
    %v1369 = vrot.slane %v1364, %v1368
    %v1370 = vlaneseq
    %v1371 = vshrl.u32 %v1370, 7
    %v1372 = vsub.s32 1, %v1371
    %v1373 = vrot.slane %v1364, %v1372
    %v1374 = vcombine.low %v1369, %v1373
    %v1376 = vunpack.c.l.s4 1983009808
    %v1377 = vunpack.c.0.s8 %v1376
    %v1378 = vlaneseq
    %v1379 = vshrl.u32 %v1378, 7
    %v1380 = vsub.s32 %v1377, %v1379
    %v1381 = vrot.slane %v1374, %v1380
    %1382 = vrot.lane.b32.xlu0 %v1381, 7
    %v1383 = vpop.permute.xlu0 %1382
    %v1384 = vrot.slane %v1383, 6
    %vm1385 = vcmask 56320
    %v1386 = vsel %vm1385, %v1384, %v1383
    %v1388 = vmul.f32 %v1362, %v1386
    %1390 = vrot.lane.b32.xlu0 %v1388, 122
    %v1391 = vpop.permute.xlu0 %1390
    %v1392 = vrot.slane %v1391, 2
    %vm1393 = vcmask 998400
    %v1394 = vsel %vm1393, %v1391, %v1392
    %v1396 = vadd.f32 %v1226, %v1394
    %s1397 = sld [smem:[#allocation5]]
    %v1398 = vstv %s1397
    %v1399 = vadd.f32 %v1396, %v1398
    %v1400 = vxor.u32 %v1399, 2147483648
    %v1401 = vmul.f32 %v1400, 1.442695
    %v1402 = vpow.pop %v1401
    %v1403 = vadd.f32 %v1402, 1.0
    %v1404 = vrcp.pop %v1403
    %v1405 = vmul.f32 1.0, %v1404
    %v1406 = vld [vmem:[#allocation6] sm:$0xff]
    %v1408 = vlaneseq
    %v1409 = vshrl.u32 %v1408, 7
    %v1410 = vsub.s32 0, %v1409
    %v1411 = vrot.slane %v1405, %v1410
    %v1412 = vlaneseq
    %v1413 = vshrl.u32 %v1412, 7
    %v1414 = vsub.s32 2, %v1413
    %v1415 = vrot.slane %v1405, %v1414
    %v1416 = vlaneseq
    %v1417 = vshrl.u32 %v1416, 7
    %v1418 = vsub.s32 4, %v1417
    %v1419 = vrot.slane %v1405, %v1418
    %v1423 = vlaneseq
    %v1424 = vshrl.u32 %v1423, 7
    %v1425 = vsub.s32 0, %v1424
    %v1426 = vrot.slane %v1411, %v1425
    %v1427 = vlaneseq
    %v1428 = vshrl.u32 %v1427, 7
    %v1429 = vsub.s32 0, %v1428
    %v1430 = vrot.slane %v1415, %v1429
    %v1431 = vlaneseq
    %v1432 = vshrl.u32 %v1431, 7
    %v1433 = vsub.s32 0, %v1432
    %v1434 = vrot.slane %v1419, %v1433
    %v1438 = vcombine.low %v1426, %v1430
    %1439 = vrot.lane.b32.xlu0 %v1438, 127
    %v1440 = vpop.permute.xlu0 %1439
    %1441 = vrot.lane.b32.xlu0 %v1434, 127
    %v1442 = vpop.permute.xlu0 %1441
    %v1443 = vrot.slane %v1440, 4
    %v1444 = vrot.slane %v1442, 4
    %v1445 = vsel %vm72, %v1443, %v1444
    %v1446 = vsel %vm578, %v1440, %v1445
    %v1448 = vmul.f32 %v1406, %v1446
    %1449 = vst [vmem:[#allocation13] sm:$0xff] %v1448
    %v1450 = vld [vmem:[%s154] sm:$0xff]
    %v1451 = vlaneseq
    %v1452 = vshrl.u32 %v1451, 7
    %v1453 = vsub.s32 1, %v1452
    %v1454 = vrot.slane %v1405, %v1453
    %v1455 = vlaneseq
    %v1456 = vshrl.u32 %v1455, 7
    %v1457 = vsub.s32 3, %v1456
    %v1458 = vrot.slane %v1405, %v1457
    %v1459 = vlaneseq
    %v1460 = vshrl.u32 %v1459, 7
    %v1461 = vsub.s32 5, %v1460
    %v1462 = vrot.slane %v1405, %v1461
    %v1466 = vlaneseq
    %v1467 = vshrl.u32 %v1466, 7
    %v1468 = vsub.s32 1, %v1467
    %v1469 = vrot.slane %v1454, %v1468
    %v1470 = vlaneseq
    %v1471 = vshrl.u32 %v1470, 7
    %v1472 = vsub.s32 1, %v1471
    %v1473 = vrot.slane %v1458, %v1472
    %v1474 = vlaneseq
    %v1475 = vshrl.u32 %v1474, 7
    %v1476 = vsub.s32 1, %v1475
    %v1477 = vrot.slane %v1462, %v1476
    %v1481 = vcombine.low %v1469, %v1473
    %1482 = vrot.lane.b32.xlu0 %v1481, 127
    %v1483 = vpop.permute.xlu0 %1482
    %1484 = vrot.lane.b32.xlu0 %v1477, 127
    %v1485 = vpop.permute.xlu0 %1484
    %v1486 = vrot.slane %v1483, 4
    %v1487 = vrot.slane %v1485, 4
    %v1488 = vsel %vm72, %v1486, %v1487
    %v1489 = vsel %vm578, %v1483, %v1488
    %v1491 = vmul.f32 %v1450, %v1489
    %s1492 = scalar_lea.vmem [#allocation13], 8
    %1493 = vst [vmem:[%s1492] sm:$0xff] %v1491
    // Predicated region
    $region30: #{tpu_custom_call.1} parent=1 // pred_check
      _
    $region31: #{tpu_custom_call.1} parent=1 // pred_check_branch
      %1495 = sbr.rel (0) target = $region33
    $region32: #{tpu_custom_call.1} parent=1 // pred_region
      %s1497 = ssub.s32 256, 256
      %1498 = vsyncadd [#allocation8], %s1497
      %s1499 = sshll.u32 [#allocation13], 4
      %s1500 = int_to_ptr.vmem [resolvable:$true] %s1499
      %1505 = dma.vmem_to_hbm [thread:$0]  %s1500, 256, %s4, [#allocation8], 128, 128, 8
    $region33: #{tpu_custom_call.1} parent=1 // pred_fallthru
      _
    // Predicated region
    $region34: #{tpu_custom_call.1} parent=1 // pred_check
      _
    $region35: #{tpu_custom_call.1} parent=1 // pred_check_branch
      %1507 = sbr.rel (0) target = $region37
    $region36: #{tpu_custom_call.1} parent=1 // pred_region
      %1508 = dma.done [#allocation8], 256
    $region37: #{tpu_custom_call.1} parent=1 // pred_fallthru
      _
    %1509 = vsyncpa [#allocation7], 1
    %1510 = vsyncpa [#allocation11], 1
    %1511 = vsyncpa [#allocation8], 1
    %1512 = vsyncpa [#allocation9], 1

</llo_original>
